<compile_context>
chip_gen: v7x
topology: tpu7x:2x2x1
jax: 0.10.0
libtpu: 0.0.40
codegen_flags: <defaults>
</compile_context>

<pallas_src>
import functools

import jax
import jax.numpy as jnp
from jax import lax
from jax.experimental import pallas as pl
from jax.experimental.pallas import tpu as pltpu

SELU_ALPHA = 1.6732632423543772
SELU_SCALE = 1.0507009873554805
NEG_BIG = 1e30

_VMEM = pl.BlockSpec(memory_space=pltpu.MemorySpace.VMEM)


def _selu(x):
    # exp(min(x,0)) guards overflow on the untaken branch; forward result is identical.
    return SELU_SCALE * jnp.where(x > 0, x, SELU_ALPHA * (jnp.exp(jnp.minimum(x, 0.0)) - 1.0))


def _round_up(v, m):
    return ((v + m - 1) // m) * m


def _pad_rows(a, rows, fill=0.0):
    r = a.shape[0]
    if r == rows:
        return a
    pad = jnp.full((rows - r,) + a.shape[1:], fill, a.dtype)
    return jnp.concatenate([a, pad], axis=0)


def _pad_block(w, rows, cols):
    w = w.astype(jnp.float32)
    out = jnp.zeros((rows, cols), jnp.float32)
    return out.at[: w.shape[0], : w.shape[1]].set(w)


# ---------------------------------------------------------------------------
# The fused kernel: whole PI_GNN forward pass, VMEM-resident.
# ---------------------------------------------------------------------------

def _pi_gnn_fused_kernel(
    h_star_ref, d_star_ref, res_ref, r_ref, inv_r_ref, inv_deg_ref, has_in_ref,
    incid_ref, recv_ne_ref, adj_sum_ref, src_oh_ref, dst_oh_ref,
    w_node_ref, w_edge_ref, w_flow_ref,
    we1a_ref, we1b_ref, we1c_ref, we2_ref, wn1a_ref, wn1b_ref, wn2_ref,
    out_ref,
    *, I, K, J, half, n_real_edges, zeta):
    f32 = jnp.float32
    bf16 = jnp.bfloat16

    # ---- load once; everything stays VMEM/vreg resident for the whole kernel ----
    h_star = h_star_ref[...]          # [N, 1]
    d_star = d_star_ref[...]          # [N, 1]
    res = res_ref[...]                # [N, 1]  reservoir mask
    r = r_ref[...]                    # [E, 1]
    inv_r = inv_r_ref[...]            # [E, 1]  precomputed 1/(r + zeta)
    inv_deg = inv_deg_ref[...]        # [N, 1]  precomputed 1/max(in_degree, 1)
    has_in = has_in_ref[...]          # [N, 1]
    incid = incid_ref[...]            # [E, N]  f32 signed incidence: incid @ h == h[src]-h[dst]
    recv_ne = recv_ne_ref[...]        # [N, E]  f32 = dst_oh^T  (scatter-add / mean / max mask)
    adj_sum = adj_sum_ref[...]        # [N, N]  f32 = dst_oh^T @ src_oh (head-sweep gather+scatter)
    src_oh_b = src_oh_ref[...]        # [E, N]  bf16 one-hot of senders (NN gathers only)
    dst_oh_b = dst_oh_ref[...]        # [E, N]  bf16 one-hot of receivers (NN gathers only)
    w_node = w_node_ref[...]          # [2, Mlp] f32
    w_edge = w_edge_ref[...]          # [2, Mlp] f32
    w_flow = w_flow_ref[...]          # [Mlp, 3] bf16 (folded Wf1@Wf2@Wf3, split per input block)

    e_pad = r.shape[0]

    def mm(a, b):                     # NN matmul: bf16 operands, f32 accumulation (MXU native)
        return jnp.dot(a.astype(bf16), b.astype(bf16), preferred_element_type=f32)

    def mm_f32(a, b):                 # physics / incidence matmul: exact f32
        return jnp.dot(a, b, preferred_element_type=f32)

    inv_exp = 1.0 / 1.852

    def net_flows(h):
        # Hazen-Williams flow from head difference: q = sign(dh) * (|dh|/r)^(1/1.852)
        dh = mm_f32(incid, h)                                   # [E,1]  h[src] - h[dst]
        base = jnp.abs(dh) * inv_r + zeta
        mag = jnp.exp(inv_exp * jnp.log(base))
        sign = jnp.where(dh > 0, 1.0, jnp.where(dh < 0, -1.0, 0.0))
        q = sign * mag
        d = mm_f32(recv_ne, q)                                  # scatter-add onto receivers
        return d, q

    def construct_heads(q):
        # head loss: hl = r * q * |q|^0.852 (signed); then J scatter-mean sweeps.
        # scatter_mean(h[src] - hl, dst) == (adj_sum @ h - recv_ne @ hl) * inv_deg,
        # so the head-loss scatter is hoisted out of the J loop and each sweep is one
        # [N,N]x[N,1] matmul instead of a gather + scatter over edges.
        hl = r * q * jnp.exp(0.852 * jnp.log(jnp.abs(q) + zeta))
        hl_scat = mm_f32(recv_ne, hl)                           # [N,1], once per call

        def body(_, h):
            agg = (mm_f32(adj_sum, h) - hl_scat) * inv_deg
            return jnp.where(res > 0, h_star, agg)              # reservoirs keep true heads

        return lax.fori_loop(0, J, body, h_star)

    # additive mask for scatter-max: 0 where edge e feeds node n, -1e30 otherwise.
    # Hoisted out of all loops (graph topology is constant).
    neg_mask = ((recv_ne - 1.0) * NEG_BIG)[:, :, None]          # [N, E, 1]

    def scatter_max(msg):
        # msg: [E, Mlp].  One vectorized masked max over a broadcast [N, E, Mlp] block.
        vals = msg[None, :, :] + neg_mask
        agg = jnp.max(vals, axis=1)                             # [N, Mlp]
        return jnp.where(has_in > 0, agg, 0.0)                  # nodes w/o in-edges -> 0

    def layer_body(li, gz):
        g, z = gz
        we1_a = we1a_ref[li]                                    # [Mlp, Mlp] bf16
        we1_b = we1b_ref[li]
        we1_c = we1c_ref[li]
        we2 = we2_ref[li]
        wn1_a = wn1a_ref[li]
        wn1_b = wn1b_ref[li]
        wn2 = wn2_ref[li]
        g_b = g.astype(bf16)
        g_src = jnp.dot(src_oh_b, g_b, preferred_element_type=f32)   # gather g[src]
        g_dst = jnp.dot(dst_oh_b, g_b, preferred_element_type=f32)   # gather g[dst]
        # split-weight matmul replaces concat([g_src, g_dst, z]) @ We1
        h1 = mm(g_src, we1_a) + mm(g_dst, we1_b) + mm(z, we1_c)
        z_new = mm(_selu(h1), we2)                              # edge / message update
        agg = scatter_max(z_new)                                # aggr='max' onto receivers
        h2 = mm(g, wn1_a) + mm(agg, wn1_b)                      # concat([g, agg]) @ Wn1
        g_new = mm(_selu(h2), wn2)                              # node update
        return g_new, z_new

    # initial flows / demands from the true heads
    d_hat0, q_hat0 = net_flows(h_star)

    def k_body(_, carry):
        d_hat, q_hat, q_tilde, h_tilde = carry
        # ---- f_1((D,Q), Theta): embeddings, I GNN layers, flows MLP ----
        # node_in(selu(cat(d_hat, d_star)))  ==  selu(d_hat)*W[0] + selu(d_star)*W[1]
        g = _selu(d_hat) * w_node[0:1, :] + _selu(d_star) * w_node[1:2, :]   # [N, Mlp]
        z = _selu(q_tilde) * w_edge[0:1, :] + _selu(q_hat) * w_edge[1:2, :]  # [E, Mlp]
        g, z = lax.fori_loop(0, I, layer_body, (g, z))
        g_b = g.astype(bf16)
        g_src = jnp.dot(src_oh_b, g_b, preferred_element_type=f32)
        g_dst = jnp.dot(dst_oh_b, g_b, preferred_element_type=f32)
        # flows_latent(selu(cat(g_src, g_dst, z))): folded linear map (no inner activations)
        dq = (mm(_selu(g_src), w_flow[:, 0:1]) + mm(_selu(g_dst), w_flow[:, 1:2])
              + mm(_selu(z), w_flow[:, 2:3]))                   # [E, 1]
        q_hat = q_hat + dq
        # directionality: first half kept, second half is its negation (no E x E matmul)
        q_top = q_hat[0:half, :]
        parts = [q_top, -q_top]
        if e_pad > n_real_edges:
            parts.append(jnp.zeros((e_pad - n_real_edges, 1), f32))
        q_hat = jnp.concatenate(parts, axis=0)
        # estimated demands (eq. 3): scatter-add onto receivers
        d_hat = mm_f32(recv_ne, q_hat)
        # ---- f_2(h, q_hat): physics-informed head reconstruction + new flows ----
        h_tilde = construct_heads(q_hat)
        _, q_tilde = net_flows(h_tilde)
        return d_hat, q_hat, q_tilde, h_tilde

    _, _, _, h_tilde = lax.fori_loop(0, K, k_body, (d_hat0, q_hat0, q_hat0, h_star))
    out_ref[...] = h_tilde


# ---------------------------------------------------------------------------
# Wrapper: one-time host-side prep (padding, incidence, weight folding), single pallas_call.
# ---------------------------------------------------------------------------

def pi_gnn_forward(params, x, edge_index, edge_attr, *,
                   n_edges, I, n_iter, r_iter=5, zeta=1e-32):
    f32 = jnp.float32
    bf16 = jnp.bfloat16
    n_nodes = x.shape[0]
    E = n_edges
    Ml = params['Wf2'].shape[0]
    Mlp = _round_up(Ml, 128)                 # lane-dense feature dim
    n_pad = max(8, _round_up(n_nodes, 8))
    e_pad = max(8, _round_up(E, 8))

    h_star = _pad_rows(x[:, 0:1].astype(f32), n_pad)
    d_star = _pad_rows(x[:, 1:2].astype(f32), n_pad)
    res_mask = (h_star != 0.0).astype(f32)
    r = _pad_rows(edge_attr[:, 0:1].astype(f32), e_pad, fill=1.0)
    inv_r = 1.0 / (r + zeta)

    src = edge_index[0]
    dst = edge_index[1]
    src_oh = _pad_rows(jax.nn.one_hot(src, n_pad, dtype=f32), e_pad)   # [E_pad, N_pad]
    dst_oh = _pad_rows(jax.nn.one_hot(dst, n_pad, dtype=f32), e_pad)
    recv_ne = jnp.transpose(dst_oh)                                    # [N_pad, E_pad]
    incid = src_oh - dst_oh                                            # [E_pad, N_pad] signed
    adj_sum = recv_ne @ src_oh                                         # [N_pad, N_pad]
    in_deg = jnp.sum(recv_ne, axis=1, keepdims=True)
    inv_deg = 1.0 / jnp.maximum(in_deg, 1.0)
    has_in = (in_deg > 0).astype(f32)
    src_oh_b = src_oh.astype(bf16)     # exact (0/1) in bf16; NN gathers only
    dst_oh_b = dst_oh.astype(bf16)

    # NN weights: zero-pad feature dim to Mlp, bf16 for MXU matmuls (f32 accumulation in-kernel);
    # embedding rows stay f32 (applied as broadcast multiplies on the VPU).
    w_node = _pad_block(params['W_node_in'], 2, Mlp)
    w_edge = _pad_block(params['W_edge'], 2, Mlp)

    # Fold the (activation-free) flows MLP Wf1 @ Wf2 @ Wf3 -> one [3Ml, 1] linear map.
    w_flow_full = (params['Wf1'].astype(f32) @ params['Wf2'].astype(f32)
                   @ params['Wf3'].astype(f32))                        # [3Ml, 1]
    w_flow = jnp.concatenate(
        [_pad_block(w_flow_full[0:Ml], Mlp, 1),
         _pad_block(w_flow_full[Ml:2 * Ml], Mlp, 1),
         _pad_block(w_flow_full[2 * Ml:3 * Ml], Mlp, 1)], axis=1).astype(bf16)   # [Mlp, 3]

    # Stack per-layer GNN weights (split per concat-block) as [I, Mlp, Mlp] bf16.
    we1a, we1b, we1c, we2s, wn1a, wn1b, wn2s = [], [], [], [], [], [], []
    for lp in params['gnn']:
        We1, We2, Wn1, Wn2 = lp['We1'], lp['We2'], lp['Wn1'], lp['Wn2']
        we1a.append(_pad_block(We1[0:Ml], Mlp, Mlp))
        we1b.append(_pad_block(We1[Ml:2 * Ml], Mlp, Mlp))
        we1c.append(_pad_block(We1[2 * Ml:3 * Ml], Mlp, Mlp))
        we2s.append(_pad_block(We2, Mlp, Mlp))
        wn1a.append(_pad_block(Wn1[0:Ml], Mlp, Mlp))
        wn1b.append(_pad_block(Wn1[Ml:2 * Ml], Mlp, Mlp))
        wn2s.append(_pad_block(Wn2, Mlp, Mlp))
    we1a = jnp.stack(we1a).astype(bf16)
    we1b = jnp.stack(we1b).astype(bf16)
    we1c = jnp.stack(we1c).astype(bf16)
    we2s = jnp.stack(we2s).astype(bf16)
    wn1a = jnp.stack(wn1a).astype(bf16)
    wn1b = jnp.stack(wn1b).astype(bf16)
    wn2s = jnp.stack(wn2s).astype(bf16)

    K = n_iter + r_iter        # evaluation path
    J = I * n_iter

    inputs = [h_star, d_star, res_mask, r, inv_r, inv_deg, has_in,
              incid, recv_ne, adj_sum, src_oh_b, dst_oh_b,
              w_node, w_edge, w_flow,
              we1a, we1b, we1c, we2s, wn1a, wn1b, wn2s]

    # Explicit VMEM budget: inputs + the [N,E,Mlp] scatter-max block + activations, with headroom.
    in_bytes = sum(a.size * a.dtype.itemsize for a in inputs)
    scratch_bytes = n_pad * e_pad * Mlp * 4 + (n_pad + 2 * e_pad) * Mlp * 4
    vmem_limit = int(min(56 << 20, max(16 << 20, 4 * (in_bytes + scratch_bytes) + (2 << 20))))

    kernel = functools.partial(_pi_gnn_fused_kernel, I=I, K=K, J=J,
                               half=E // 2, n_real_edges=E, zeta=zeta)
    out = pl.pallas_call(
        kernel,
        out_shape=jax.ShapeDtypeStruct((n_pad, 1), f32),
        in_specs=[_VMEM] * len(inputs),
        out_specs=_VMEM,
        compiler_params=pltpu.CompilerParams(vmem_limit_bytes=vmem_limit),
    )(*inputs)
    return out[:n_nodes]


# ---------------------------------------------------------------------------
# Deterministic parameter init (bias=False everywhere)
# ---------------------------------------------------------------------------

def init_params(key, M_n, M_e, M_l, out_dim, I):
    def lin(k, fan_in, fan_out):
        return (jax.random.normal(k, (fan_in, fan_out), jnp.float32)
                / jnp.sqrt(jnp.float32(fan_in)))
    keys = jax.random.split(key, 5 + 4 * I)
    params = {
        'W_node_in': lin(keys[0], M_n, M_l),
        'W_edge': lin(keys[1], M_e, M_l),
        'Wf1': lin(keys[2], 3 * M_l, M_l),
        'Wf2': lin(keys[3], M_l, M_l),
        'Wf3': lin(keys[4], M_l, out_dim),
        'gnn': [],
    }
    for i in range(I):
        k = keys[5 + 4 * i: 5 + 4 * (i + 1)]
        params['gnn'].append({
            'We1': lin(k[0], 3 * M_l, M_l),
            'We2': lin(k[1], M_l, M_l),
            'Wn1': lin(k[2], 2 * M_l, M_l),
            'Wn2': lin(k[3], M_l, M_l),
        })
    return params


if __name__ == "__main__":
    key = jax.random.PRNGKey(0)
    M_n, M_e, M_l, out_dim = 2, 2, 32, 1
    I, n_iter, r_iter = 2, 1, 1

    n_nodes = 8
    n_pipes = 8
    n_edges = 2 * n_pipes
    # ring network: pipe p connects p -> (p+1) % n_nodes; second half are reversed copies
    fwd_src = jnp.arange(n_pipes, dtype=jnp.int32)
    fwd_dst = (fwd_src + 1) % n_nodes
    edge_index = jnp.stack([jnp.concatenate([fwd_src, fwd_dst]),
                            jnp.concatenate([fwd_dst, fwd_src])])

    k1, k2, k3 = jax.random.split(key, 3)
    r_half = jax.random.uniform(k1, (n_pipes, 1), jnp.float32, 0.5, 1.5)
    edge_attr = jnp.concatenate([jnp.tile(r_half, (2, 1)),
                                 jnp.zeros((n_edges, 1), jnp.float32)], axis=-1)  # col 0 = r
    demands = jax.random.uniform(k2, (n_nodes, 1), jnp.float32, 0.1, 0.5).at[0, 0].set(0.0)
    heads = jnp.zeros((n_nodes, 1), jnp.float32).at[0, 0].set(1.0)   # node 0 is the reservoir
    x = jnp.concatenate([heads, demands], axis=-1)                   # [:,0]=h_star, [:,1]=d_star

    params = init_params(k3, M_n, M_e, M_l, out_dim, I)

    fwd = jax.jit(functools.partial(pi_gnn_forward, n_edges=n_edges,
                                    I=I, n_iter=n_iter, r_iter=r_iter))
    h_tilde = fwd(params, x, edge_index, edge_attr)
    h_tilde = jax.block_until_ready(h_tilde)

    assert h_tilde.shape == (n_nodes, 1)
    assert bool(jnp.all(jnp.isfinite(h_tilde)))
    print("KERNEL_OK")
</pallas_src>

<mosaic_0001>
module attributes {stable_mosaic.version = 11 : i64} {
  func.func @_pi_gnn_fused_kernel(%arg0: memref<8x1xf32, #tpu.memory_space<vmem>>, %arg1: memref<8x1xf32, #tpu.memory_space<vmem>>, %arg2: memref<8x1xf32, #tpu.memory_space<vmem>>, %arg3: memref<16x1xf32, #tpu.memory_space<vmem>>, %arg4: memref<16x1xf32, #tpu.memory_space<vmem>>, %arg5: memref<8x1xf32, #tpu.memory_space<vmem>>, %arg6: memref<8x1xf32, #tpu.memory_space<vmem>>, %arg7: memref<16x8xf32, #tpu.memory_space<vmem>>, %arg8: memref<8x16xf32, #tpu.memory_space<vmem>>, %arg9: memref<8x8xf32, #tpu.memory_space<vmem>>, %arg10: memref<16x8xbf16, #tpu.memory_space<vmem>>, %arg11: memref<16x8xbf16, #tpu.memory_space<vmem>>, %arg12: memref<2x128xf32, #tpu.memory_space<vmem>>, %arg13: memref<2x128xf32, #tpu.memory_space<vmem>>, %arg14: memref<128x3xbf16, #tpu.memory_space<vmem>>, %arg15: memref<2x128x128xbf16, #tpu.memory_space<vmem>>, %arg16: memref<2x128x128xbf16, #tpu.memory_space<vmem>>, %arg17: memref<2x128x128xbf16, #tpu.memory_space<vmem>>, %arg18: memref<2x128x128xbf16, #tpu.memory_space<vmem>>, %arg19: memref<2x128x128xbf16, #tpu.memory_space<vmem>>, %arg20: memref<2x128x128xbf16, #tpu.memory_space<vmem>>, %arg21: memref<2x128x128xbf16, #tpu.memory_space<vmem>>, %arg22: memref<8x1xf32, #tpu.memory_space<vmem>>) attributes {dimension_semantics = [], scalar_prefetch = 0 : i64, scratch_operands = 0 : i64, tpu.core_type = #tpu.core_type<tc>} {
    %c0 = arith.constant 0 : index
    %c0_0 = arith.constant 0 : index
    %0 = vector.load %arg0[%c0, %c0_0] : memref<8x1xf32, #tpu.memory_space<vmem>>, vector<8x1xf32>
    %c0_1 = arith.constant 0 : index
    %c0_2 = arith.constant 0 : index
    %1 = vector.load %arg1[%c0_1, %c0_2] : memref<8x1xf32, #tpu.memory_space<vmem>>, vector<8x1xf32>
    %c0_3 = arith.constant 0 : index
    %c0_4 = arith.constant 0 : index
    %2 = vector.load %arg2[%c0_3, %c0_4] : memref<8x1xf32, #tpu.memory_space<vmem>>, vector<8x1xf32>
    %c0_5 = arith.constant 0 : index
    %c0_6 = arith.constant 0 : index
    %3 = vector.load %arg3[%c0_5, %c0_6] : memref<16x1xf32, #tpu.memory_space<vmem>>, vector<16x1xf32>
    %c0_7 = arith.constant 0 : index
    %c0_8 = arith.constant 0 : index
    %4 = vector.load %arg4[%c0_7, %c0_8] : memref<16x1xf32, #tpu.memory_space<vmem>>, vector<16x1xf32>
    %c0_9 = arith.constant 0 : index
    %c0_10 = arith.constant 0 : index
    %5 = vector.load %arg5[%c0_9, %c0_10] : memref<8x1xf32, #tpu.memory_space<vmem>>, vector<8x1xf32>
    %c0_11 = arith.constant 0 : index
    %c0_12 = arith.constant 0 : index
    %6 = vector.load %arg6[%c0_11, %c0_12] : memref<8x1xf32, #tpu.memory_space<vmem>>, vector<8x1xf32>
    %c0_13 = arith.constant 0 : index
    %c0_14 = arith.constant 0 : index
    %7 = vector.load %arg7[%c0_13, %c0_14] : memref<16x8xf32, #tpu.memory_space<vmem>>, vector<16x8xf32>
    %c0_15 = arith.constant 0 : index
    %c0_16 = arith.constant 0 : index
    %8 = vector.load %arg8[%c0_15, %c0_16] : memref<8x16xf32, #tpu.memory_space<vmem>>, vector<8x16xf32>
    %c0_17 = arith.constant 0 : index
    %c0_18 = arith.constant 0 : index
    %9 = vector.load %arg9[%c0_17, %c0_18] : memref<8x8xf32, #tpu.memory_space<vmem>>, vector<8x8xf32>
    %c0_19 = arith.constant 0 : index
    %c0_20 = arith.constant 0 : index
    %10 = vector.load %arg10[%c0_19, %c0_20] : memref<16x8xbf16, #tpu.memory_space<vmem>>, vector<16x8xbf16>
    %c0_21 = arith.constant 0 : index
    %c0_22 = arith.constant 0 : index
    %11 = vector.load %arg11[%c0_21, %c0_22] : memref<16x8xbf16, #tpu.memory_space<vmem>>, vector<16x8xbf16>
    %c0_23 = arith.constant 0 : index
    %c0_24 = arith.constant 0 : index
    %12 = vector.load %arg12[%c0_23, %c0_24] : memref<2x128xf32, #tpu.memory_space<vmem>>, vector<2x128xf32>
    %c0_25 = arith.constant 0 : index
    %c0_26 = arith.constant 0 : index
    %13 = vector.load %arg13[%c0_25, %c0_26] : memref<2x128xf32, #tpu.memory_space<vmem>>, vector<2x128xf32>
    %c0_27 = arith.constant 0 : index
    %c0_28 = arith.constant 0 : index
    %14 = vector.load %arg14[%c0_27, %c0_28] : memref<128x3xbf16, #tpu.memory_space<vmem>>, vector<128x3xbf16>
    %cst = arith.constant 1.000000e+00 : f32
    %15 = vector.broadcast %cst : f32 to vector<8x16xf32>
    %16 = arith.subf %8, %15 : vector<8x16xf32>
    %cst_29 = arith.constant 1.000000e+30 : f32
    %17 = vector.broadcast %cst_29 : f32 to vector<8x16xf32>
    %18 = arith.mulf %16, %17 : vector<8x16xf32>
    %19 = vector.shape_cast %18 : vector<8x16xf32> to vector<8x16x1xf32>
    %cst_30 = arith.constant dense<0.000000e+00> : vector<16x1xf32>
    %20 = tpu.matmul %7, %0, %cst_30 {dimension_numbers = #tpu.dot_dimension_numbers<[1], [0], [0], [1], [0, 0, 1, 1], [], []>} : vector<16x8xf32>, vector<8x1xf32>, vector<16x1xf32> -> vector<16x1xf32>
    %21 = math.absf %20 : vector<16x1xf32>
    %22 = arith.mulf %21, %4 : vector<16x1xf32>
    %cst_31 = arith.constant 1.000000e-32 : f32
    %23 = vector.broadcast %cst_31 : f32 to vector<16x1xf32>
    %24 = arith.addf %22, %23 : vector<16x1xf32>
    %25 = math.log %24 : vector<16x1xf32>
    %cst_32 = arith.constant 0.539956808 : f32
    %26 = vector.broadcast %cst_32 : f32 to vector<16x1xf32>
    %27 = arith.mulf %26, %25 : vector<16x1xf32>
    %28 = math.exp %27 : vector<16x1xf32>
    %cst_33 = arith.constant 0.000000e+00 : f32
    %29 = vector.broadcast %cst_33 : f32 to vector<16x1xf32>
    %30 = arith.cmpf ogt, %20, %29 : vector<16x1xf32>
    %cst_34 = arith.constant 0.000000e+00 : f32
    %31 = vector.broadcast %cst_34 : f32 to vector<16x1xf32>
    %32 = arith.cmpf olt, %20, %31 : vector<16x1xf32>
    %cst_35 = arith.constant -1.000000e+00 : f32
    %cst_36 = arith.constant 0.000000e+00 : f32
    %33 = vector.broadcast %cst_35 : f32 to vector<16x1xf32>
    %34 = vector.broadcast %cst_36 : f32 to vector<16x1xf32>
    %35 = arith.select %32, %33, %34 : vector<16x1xi1>, vector<16x1xf32>
    %cst_37 = arith.constant 1.000000e+00 : f32
    %36 = vector.broadcast %cst_37 : f32 to vector<16x1xf32>
    %37 = arith.select %30, %36, %35 : vector<16x1xi1>, vector<16x1xf32>
    %38 = arith.mulf %37, %28 : vector<16x1xf32>
    %cst_38 = arith.constant dense<0.000000e+00> : vector<8x1xf32>
    %39 = tpu.matmul %8, %38, %cst_38 {dimension_numbers = #tpu.dot_dimension_numbers<[1], [0], [0], [1], [0, 0, 1, 1], [], []>} : vector<8x16xf32>, vector<16x1xf32>, vector<8x1xf32> -> vector<8x1xf32>
    %c0_i32 = arith.constant 0 : i32
    %c2_i32 = arith.constant 2 : i32
    %40 = arith.addi %c0_i32, %c2_i32 : i32
    %c1_i32 = arith.constant 1 : i32
    %41:4 = scf.for %arg23 = %c0_i32 to %40 step %c1_i32 iter_args(%arg24 = %39, %arg25 = %38, %arg26 = %38, %arg27 = %0) -> (vector<8x1xf32>, vector<16x1xf32>, vector<16x1xf32>, vector<8x1xf32>)  : i32 {
      %cst_41 = arith.constant 0.000000e+00 : f32
      %43 = vector.broadcast %cst_41 : f32 to vector<8x1xf32>
      %44 = arith.cmpf ogt, %arg24, %43 : vector<8x1xf32>
      %cst_42 = arith.constant 0.000000e+00 : f32
      %45 = vector.broadcast %cst_42 : f32 to vector<8x1xf32>
      %46 = arith.minimumf %arg24, %45 : vector<8x1xf32>
      %47 = math.exp %46 : vector<8x1xf32>
      %cst_43 = arith.constant 1.000000e+00 : f32
      %48 = vector.broadcast %cst_43 : f32 to vector<8x1xf32>
      %49 = arith.subf %47, %48 : vector<8x1xf32>
      %cst_44 = arith.constant 1.67326319 : f32
      %50 = vector.broadcast %cst_44 : f32 to vector<8x1xf32>
      %51 = arith.mulf %50, %49 : vector<8x1xf32>
      %52 = arith.select %44, %arg24, %51 : vector<8x1xi1>, vector<8x1xf32>
      %cst_45 = arith.constant 1.05070102 : f32
      %53 = vector.broadcast %cst_45 : f32 to vector<8x1xf32>
      %54 = arith.mulf %53, %52 : vector<8x1xf32>
      %55 = vector.extract_strided_slice %12 {offsets = [0, 0], sizes = [1, 128], strides = [1, 1]} : vector<2x128xf32> to vector<1x128xf32>
      %56 = vector.broadcast %54 : vector<8x1xf32> to vector<8x128xf32>
      %57 = vector.broadcast %55 : vector<1x128xf32> to vector<8x128xf32>
      %58 = arith.mulf %56, %57 : vector<8x128xf32>
      %cst_46 = arith.constant 0.000000e+00 : f32
      %59 = vector.broadcast %cst_46 : f32 to vector<8x1xf32>
      %60 = arith.cmpf ogt, %1, %59 : vector<8x1xf32>
      %cst_47 = arith.constant 0.000000e+00 : f32
      %61 = vector.broadcast %cst_47 : f32 to vector<8x1xf32>
      %62 = arith.minimumf %1, %61 : vector<8x1xf32>
      %63 = math.exp %62 : vector<8x1xf32>
      %cst_48 = arith.constant 1.000000e+00 : f32
      %64 = vector.broadcast %cst_48 : f32 to vector<8x1xf32>
      %65 = arith.subf %63, %64 : vector<8x1xf32>
      %cst_49 = arith.constant 1.67326319 : f32
      %66 = vector.broadcast %cst_49 : f32 to vector<8x1xf32>
      %67 = arith.mulf %66, %65 : vector<8x1xf32>
      %68 = arith.select %60, %1, %67 : vector<8x1xi1>, vector<8x1xf32>
      %cst_50 = arith.constant 1.05070102 : f32
      %69 = vector.broadcast %cst_50 : f32 to vector<8x1xf32>
      %70 = arith.mulf %69, %68 : vector<8x1xf32>
      %71 = vector.extract_strided_slice %12 {offsets = [1, 0], sizes = [1, 128], strides = [1, 1]} : vector<2x128xf32> to vector<1x128xf32>
      %72 = vector.broadcast %70 : vector<8x1xf32> to vector<8x128xf32>
      %73 = vector.broadcast %71 : vector<1x128xf32> to vector<8x128xf32>
      %74 = arith.mulf %72, %73 : vector<8x128xf32>
      %75 = arith.addf %58, %74 : vector<8x128xf32>
      %cst_51 = arith.constant 0.000000e+00 : f32
      %76 = vector.broadcast %cst_51 : f32 to vector<16x1xf32>
      %77 = arith.cmpf ogt, %arg26, %76 : vector<16x1xf32>
      %cst_52 = arith.constant 0.000000e+00 : f32
      %78 = vector.broadcast %cst_52 : f32 to vector<16x1xf32>
      %79 = arith.minimumf %arg26, %78 : vector<16x1xf32>
      %80 = math.exp %79 : vector<16x1xf32>
      %cst_53 = arith.constant 1.000000e+00 : f32
      %81 = vector.broadcast %cst_53 : f32 to vector<16x1xf32>
      %82 = arith.subf %80, %81 : vector<16x1xf32>
      %cst_54 = arith.constant 1.67326319 : f32
      %83 = vector.broadcast %cst_54 : f32 to vector<16x1xf32>
      %84 = arith.mulf %83, %82 : vector<16x1xf32>
      %85 = arith.select %77, %arg26, %84 : vector<16x1xi1>, vector<16x1xf32>
      %cst_55 = arith.constant 1.05070102 : f32
      %86 = vector.broadcast %cst_55 : f32 to vector<16x1xf32>
      %87 = arith.mulf %86, %85 : vector<16x1xf32>
      %88 = vector.extract_strided_slice %13 {offsets = [0, 0], sizes = [1, 128], strides = [1, 1]} : vector<2x128xf32> to vector<1x128xf32>
      %89 = vector.broadcast %87 : vector<16x1xf32> to vector<16x128xf32>
      %90 = vector.broadcast %88 : vector<1x128xf32> to vector<16x128xf32>
      %91 = arith.mulf %89, %90 : vector<16x128xf32>
      %cst_56 = arith.constant 0.000000e+00 : f32
      %92 = vector.broadcast %cst_56 : f32 to vector<16x1xf32>
      %93 = arith.cmpf ogt, %arg25, %92 : vector<16x1xf32>
      %cst_57 = arith.constant 0.000000e+00 : f32
      %94 = vector.broadcast %cst_57 : f32 to vector<16x1xf32>
      %95 = arith.minimumf %arg25, %94 : vector<16x1xf32>
      %96 = math.exp %95 : vector<16x1xf32>
      %cst_58 = arith.constant 1.000000e+00 : f32
      %97 = vector.broadcast %cst_58 : f32 to vector<16x1xf32>
      %98 = arith.subf %96, %97 : vector<16x1xf32>
      %cst_59 = arith.constant 1.67326319 : f32
      %99 = vector.broadcast %cst_59 : f32 to vector<16x1xf32>
      %100 = arith.mulf %99, %98 : vector<16x1xf32>
      %101 = arith.select %93, %arg25, %100 : vector<16x1xi1>, vector<16x1xf32>
      %cst_60 = arith.constant 1.05070102 : f32
      %102 = vector.broadcast %cst_60 : f32 to vector<16x1xf32>
      %103 = arith.mulf %102, %101 : vector<16x1xf32>
      %104 = vector.extract_strided_slice %13 {offsets = [1, 0], sizes = [1, 128], strides = [1, 1]} : vector<2x128xf32> to vector<1x128xf32>
      %105 = vector.broadcast %103 : vector<16x1xf32> to vector<16x128xf32>
      %106 = vector.broadcast %104 : vector<1x128xf32> to vector<16x128xf32>
      %107 = arith.mulf %105, %106 : vector<16x128xf32>
      %108 = arith.addf %91, %107 : vector<16x128xf32>
      %c0_i32_61 = arith.constant 0 : i32
      %c2_i32_62 = arith.constant 2 : i32
      %109 = arith.addi %c0_i32_61, %c2_i32_62 : i32
      %c1_i32_63 = arith.constant 1 : i32
      %110:2 = scf.for %arg28 = %c0_i32_61 to %109 step %c1_i32_63 iter_args(%arg29 = %75, %arg30 = %108) -> (vector<8x128xf32>, vector<16x128xf32>)  : i32 {
        %198 = arith.index_cast %arg28 : i32 to index
        %c0_101 = arith.constant 0 : index
        %c0_102 = arith.constant 0 : index
        %199 = vector.load %arg15[%198, %c0_101, %c0_102] : memref<2x128x128xbf16, #tpu.memory_space<vmem>>, vector<1x128x128xbf16>
        %200 = vector.shape_cast %199 : vector<1x128x128xbf16> to vector<128x128xbf16>
        %201 = arith.index_cast %arg28 : i32 to index
        %c0_103 = arith.constant 0 : index
        %c0_104 = arith.constant 0 : index
        %202 = vector.load %arg16[%201, %c0_103, %c0_104] : memref<2x128x128xbf16, #tpu.memory_space<vmem>>, vector<1x128x128xbf16>
        %203 = vector.shape_cast %202 : vector<1x128x128xbf16> to vector<128x128xbf16>
        %204 = arith.index_cast %arg28 : i32 to index
        %c0_105 = arith.constant 0 : index
        %c0_106 = arith.constant 0 : index
        %205 = vector.load %arg17[%204, %c0_105, %c0_106] : memref<2x128x128xbf16, #tpu.memory_space<vmem>>, vector<1x128x128xbf16>
        %206 = vector.shape_cast %205 : vector<1x128x128xbf16> to vector<128x128xbf16>
        %207 = arith.index_cast %arg28 : i32 to index
        %c0_107 = arith.constant 0 : index
        %c0_108 = arith.constant 0 : index
        %208 = vector.load %arg18[%207, %c0_107, %c0_108] : memref<2x128x128xbf16, #tpu.memory_space<vmem>>, vector<1x128x128xbf16>
        %209 = vector.shape_cast %208 : vector<1x128x128xbf16> to vector<128x128xbf16>
        %210 = arith.index_cast %arg28 : i32 to index
        %c0_109 = arith.constant 0 : index
        %c0_110 = arith.constant 0 : index
        %211 = vector.load %arg19[%210, %c0_109, %c0_110] : memref<2x128x128xbf16, #tpu.memory_space<vmem>>, vector<1x128x128xbf16>
        %212 = vector.shape_cast %211 : vector<1x128x128xbf16> to vector<128x128xbf16>
        %213 = arith.index_cast %arg28 : i32 to index
        %c0_111 = arith.constant 0 : index
        %c0_112 = arith.constant 0 : index
        %214 = vector.load %arg20[%213, %c0_111, %c0_112] : memref<2x128x128xbf16, #tpu.memory_space<vmem>>, vector<1x128x128xbf16>
        %215 = vector.shape_cast %214 : vector<1x128x128xbf16> to vector<128x128xbf16>
        %216 = arith.index_cast %arg28 : i32 to index
        %c0_113 = arith.constant 0 : index
        %c0_114 = arith.constant 0 : index
        %217 = vector.load %arg21[%216, %c0_113, %c0_114] : memref<2x128x128xbf16, #tpu.memory_space<vmem>>, vector<1x128x128xbf16>
        %218 = vector.shape_cast %217 : vector<1x128x128xbf16> to vector<128x128xbf16>
        %219 = arith.truncf %arg29 : vector<8x128xf32> to vector<8x128xbf16>
        %cst_115 = arith.constant dense<0.000000e+00> : vector<16x128xf32>
        %220 = tpu.matmul %10, %219, %cst_115 {dimension_numbers = #tpu.dot_dimension_numbers<[1], [0], [0], [1], [0, 0, 1, 1], [], []>} : vector<16x8xbf16>, vector<8x128xbf16>, vector<16x128xf32> -> vector<16x128xf32>
        %cst_116 = arith.constant dense<0.000000e+00> : vector<16x128xf32>
        %221 = tpu.matmul %11, %219, %cst_116 {dimension_numbers = #tpu.dot_dimension_numbers<[1], [0], [0], [1], [0, 0, 1, 1], [], []>} : vector<16x8xbf16>, vector<8x128xbf16>, vector<16x128xf32> -> vector<16x128xf32>
        %222 = arith.truncf %220 : vector<16x128xf32> to vector<16x128xbf16>
        %cst_117 = arith.constant dense<0.000000e+00> : vector<16x128xf32>
        %223 = tpu.matmul %222, %200, %cst_117 {dimension_numbers = #tpu.dot_dimension_numbers<[1], [0], [0], [1], [0, 0, 1, 1], [], []>} : vector<16x128xbf16>, vector<128x128xbf16>, vector<16x128xf32> -> vector<16x128xf32>
        %224 = arith.truncf %221 : vector<16x128xf32> to vector<16x128xbf16>
        %cst_118 = arith.constant dense<0.000000e+00> : vector<16x128xf32>
        %225 = tpu.matmul %224, %203, %cst_118 {dimension_numbers = #tpu.dot_dimension_numbers<[1], [0], [0], [1], [0, 0, 1, 1], [], []>} : vector<16x128xbf16>, vector<128x128xbf16>, vector<16x128xf32> -> vector<16x128xf32>
        %226 = arith.addf %223, %225 : vector<16x128xf32>
        %227 = arith.truncf %arg30 : vector<16x128xf32> to vector<16x128xbf16>
        %cst_119 = arith.constant dense<0.000000e+00> : vector<16x128xf32>
        %228 = tpu.matmul %227, %206, %cst_119 {dimension_numbers = #tpu.dot_dimension_numbers<[1], [0], [0], [1], [0, 0, 1, 1], [], []>} : vector<16x128xbf16>, vector<128x128xbf16>, vector<16x128xf32> -> vector<16x128xf32>
        %229 = arith.addf %226, %228 : vector<16x128xf32>
        %cst_120 = arith.constant 0.000000e+00 : f32
        %230 = vector.broadcast %cst_120 : f32 to vector<16x128xf32>
        %231 = arith.cmpf ogt, %229, %230 : vector<16x128xf32>
        %cst_121 = arith.constant 0.000000e+00 : f32
        %232 = vector.broadcast %cst_121 : f32 to vector<16x128xf32>
        %233 = arith.minimumf %229, %232 : vector<16x128xf32>
        %234 = math.exp %233 : vector<16x128xf32>
        %cst_122 = arith.constant 1.000000e+00 : f32
        %235 = vector.broadcast %cst_122 : f32 to vector<16x128xf32>
        %236 = arith.subf %234, %235 : vector<16x128xf32>
        %cst_123 = arith.constant 1.67326319 : f32
        %237 = vector.broadcast %cst_123 : f32 to vector<16x128xf32>
        %238 = arith.mulf %237, %236 : vector<16x128xf32>
        %239 = arith.select %231, %229, %238 : vector<16x128xi1>, vector<16x128xf32>
        %cst_124 = arith.constant 1.05070102 : f32
        %240 = vector.broadcast %cst_124 : f32 to vector<16x128xf32>
        %241 = arith.mulf %240, %239 : vector<16x128xf32>
        %242 = arith.truncf %241 : vector<16x128xf32> to vector<16x128xbf16>
        %cst_125 = arith.constant dense<0.000000e+00> : vector<16x128xf32>
        %243 = tpu.matmul %242, %209, %cst_125 {dimension_numbers = #tpu.dot_dimension_numbers<[1], [0], [0], [1], [0, 0, 1, 1], [], []>} : vector<16x128xbf16>, vector<128x128xbf16>, vector<16x128xf32> -> vector<16x128xf32>
        %244 = vector.shape_cast %243 : vector<16x128xf32> to vector<1x16x128xf32>
        %245 = vector.broadcast %244 : vector<1x16x128xf32> to vector<8x16x128xf32>
        %246 = vector.broadcast %19 : vector<8x16x1xf32> to vector<8x16x128xf32>
        %247 = arith.addf %245, %246 : vector<8x16x128xf32>
        %cst_126 = arith.constant dense<0xFF800000> : vector<8x128xf32>
        %248 = vector.multi_reduction <maximumf>, %247, %cst_126 [1] : vector<8x16x128xf32> to vector<8x128xf32>
        %cst_127 = arith.constant 0.000000e+00 : f32
        %249 = vector.broadcast %cst_127 : f32 to vector<8x1xf32>
        %250 = arith.cmpf ogt, %6, %249 : vector<8x1xf32>
        %cst_128 = arith.constant 0.000000e+00 : f32
        %251 = vector.shape_cast %250 : vector<8x1xi1> to vector<8x1xi1>
        %252 = vector.broadcast %251 : vector<8x1xi1> to vector<8x128xi1>
        %253 = vector.broadcast %cst_128 : f32 to vector<8x128xf32>
        %254 = arith.select %252, %248, %253 : vector<8x128xi1>, vector<8x128xf32>
        %255 = arith.truncf %arg29 : vector<8x128xf32> to vector<8x128xbf16>
        %cst_129 = arith.constant dense<0.000000e+00> : vector<8x128xf32>
        %256 = tpu.matmul %255, %212, %cst_129 {dimension_numbers = #tpu.dot_dimension_numbers<[1], [0], [0], [1], [0, 0, 1, 1], [], []>} : vector<8x128xbf16>, vector<128x128xbf16>, vector<8x128xf32> -> vector<8x128xf32>
        %257 = arith.truncf %254 : vector<8x128xf32> to vector<8x128xbf16>
        %cst_130 = arith.constant dense<0.000000e+00> : vector<8x128xf32>
        %258 = tpu.matmul %257, %215, %cst_130 {dimension_numbers = #tpu.dot_dimension_numbers<[1], [0], [0], [1], [0, 0, 1, 1], [], []>} : vector<8x128xbf16>, vector<128x128xbf16>, vector<8x128xf32> -> vector<8x128xf32>
        %259 = arith.addf %256, %258 : vector<8x128xf32>
        %cst_131 = arith.constant 0.000000e+00 : f32
        %260 = vector.broadcast %cst_131 : f32 to vector<8x128xf32>
        %261 = arith.cmpf ogt, %259, %260 : vector<8x128xf32>
        %cst_132 = arith.constant 0.000000e+00 : f32
        %262 = vector.broadcast %cst_132 : f32 to vector<8x128xf32>
        %263 = arith.minimumf %259, %262 : vector<8x128xf32>
        %264 = math.exp %263 : vector<8x128xf32>
        %cst_133 = arith.constant 1.000000e+00 : f32
        %265 = vector.broadcast %cst_133 : f32 to vector<8x128xf32>
        %266 = arith.subf %264, %265 : vector<8x128xf32>
        %cst_134 = arith.constant 1.67326319 : f32
        %267 = vector.broadcast %cst_134 : f32 to vector<8x128xf32>
        %268 = arith.mulf %267, %266 : vector<8x128xf32>
        %269 = arith.select %261, %259, %268 : vector<8x128xi1>, vector<8x128xf32>
        %cst_135 = arith.constant 1.05070102 : f32
        %270 = vector.broadcast %cst_135 : f32 to vector<8x128xf32>
        %271 = arith.mulf %270, %269 : vector<8x128xf32>
        %272 = arith.truncf %271 : vector<8x128xf32> to vector<8x128xbf16>
        %cst_136 = arith.constant dense<0.000000e+00> : vector<8x128xf32>
        %273 = tpu.matmul %272, %218, %cst_136 {dimension_numbers = #tpu.dot_dimension_numbers<[1], [0], [0], [1], [0, 0, 1, 1], [], []>} : vector<8x128xbf16>, vector<128x128xbf16>, vector<8x128xf32> -> vector<8x128xf32>
        scf.yield %273, %243 : vector<8x128xf32>, vector<16x128xf32>
      }
      %c2_i32_64 = arith.constant 2 : i32
      %111 = arith.truncf %110#0 : vector<8x128xf32> to vector<8x128xbf16>
      %cst_65 = arith.constant dense<0.000000e+00> : vector<16x128xf32>
      %112 = tpu.matmul %10, %111, %cst_65 {dimension_numbers = #tpu.dot_dimension_numbers<[1], [0], [0], [1], [0, 0, 1, 1], [], []>} : vector<16x8xbf16>, vector<8x128xbf16>, vector<16x128xf32> -> vector<16x128xf32>
      %cst_66 = arith.constant dense<0.000000e+00> : vector<16x128xf32>
      %113 = tpu.matmul %11, %111, %cst_66 {dimension_numbers = #tpu.dot_dimension_numbers<[1], [0], [0], [1], [0, 0, 1, 1], [], []>} : vector<16x8xbf16>, vector<8x128xbf16>, vector<16x128xf32> -> vector<16x128xf32>
      %cst_67 = arith.constant 0.000000e+00 : f32
      %114 = vector.broadcast %cst_67 : f32 to vector<16x128xf32>
      %115 = arith.cmpf ogt, %112, %114 : vector<16x128xf32>
      %cst_68 = arith.constant 0.000000e+00 : f32
      %116 = vector.broadcast %cst_68 : f32 to vector<16x128xf32>
      %117 = arith.minimumf %112, %116 : vector<16x128xf32>
      %118 = math.exp %117 : vector<16x128xf32>
      %cst_69 = arith.constant 1.000000e+00 : f32
      %119 = vector.broadcast %cst_69 : f32 to vector<16x128xf32>
      %120 = arith.subf %118, %119 : vector<16x128xf32>
      %cst_70 = arith.constant 1.67326319 : f32
      %121 = vector.broadcast %cst_70 : f32 to vector<16x128xf32>
      %122 = arith.mulf %121, %120 : vector<16x128xf32>
      %123 = arith.select %115, %112, %122 : vector<16x128xi1>, vector<16x128xf32>
      %cst_71 = arith.constant 1.05070102 : f32
      %124 = vector.broadcast %cst_71 : f32 to vector<16x128xf32>
      %125 = arith.mulf %124, %123 : vector<16x128xf32>
      %126 = vector.extract_strided_slice %14 {offsets = [0, 0], sizes = [128, 1], strides = [1, 1]} : vector<128x3xbf16> to vector<128x1xbf16>
      %127 = arith.truncf %125 : vector<16x128xf32> to vector<16x128xbf16>
      %cst_72 = arith.constant dense<0.000000e+00> : vector<16x1xf32>
      %128 = tpu.matmul %127, %126, %cst_72 {dimension_numbers = #tpu.dot_dimension_numbers<[1], [0], [0], [1], [0, 0, 1, 1], [], []>} : vector<16x128xbf16>, vector<128x1xbf16>, vector<16x1xf32> -> vector<16x1xf32>
      %cst_73 = arith.constant 0.000000e+00 : f32
      %129 = vector.broadcast %cst_73 : f32 to vector<16x128xf32>
      %130 = arith.cmpf ogt, %113, %129 : vector<16x128xf32>
      %cst_74 = arith.constant 0.000000e+00 : f32
      %131 = vector.broadcast %cst_74 : f32 to vector<16x128xf32>
      %132 = arith.minimumf %113, %131 : vector<16x128xf32>
      %133 = math.exp %132 : vector<16x128xf32>
      %cst_75 = arith.constant 1.000000e+00 : f32
      %134 = vector.broadcast %cst_75 : f32 to vector<16x128xf32>
      %135 = arith.subf %133, %134 : vector<16x128xf32>
      %cst_76 = arith.constant 1.67326319 : f32
      %136 = vector.broadcast %cst_76 : f32 to vector<16x128xf32>
      %137 = arith.mulf %136, %135 : vector<16x128xf32>
      %138 = arith.select %130, %113, %137 : vector<16x128xi1>, vector<16x128xf32>
      %cst_77 = arith.constant 1.05070102 : f32
      %139 = vector.broadcast %cst_77 : f32 to vector<16x128xf32>
      %140 = arith.mulf %139, %138 : vector<16x128xf32>
      %141 = vector.extract_strided_slice %14 {offsets = [0, 1], sizes = [128, 1], strides = [1, 1]} : vector<128x3xbf16> to vector<128x1xbf16>
      %142 = arith.truncf %140 : vector<16x128xf32> to vector<16x128xbf16>
      %cst_78 = arith.constant dense<0.000000e+00> : vector<16x1xf32>
      %143 = tpu.matmul %142, %141, %cst_78 {dimension_numbers = #tpu.dot_dimension_numbers<[1], [0], [0], [1], [0, 0, 1, 1], [], []>} : vector<16x128xbf16>, vector<128x1xbf16>, vector<16x1xf32> -> vector<16x1xf32>
      %144 = arith.addf %128, %143 : vector<16x1xf32>
      %cst_79 = arith.constant 0.000000e+00 : f32
      %145 = vector.broadcast %cst_79 : f32 to vector<16x128xf32>
      %146 = arith.cmpf ogt, %110#1, %145 : vector<16x128xf32>
      %cst_80 = arith.constant 0.000000e+00 : f32
      %147 = vector.broadcast %cst_80 : f32 to vector<16x128xf32>
      %148 = arith.minimumf %110#1, %147 : vector<16x128xf32>
      %149 = math.exp %148 : vector<16x128xf32>
      %cst_81 = arith.constant 1.000000e+00 : f32
      %150 = vector.broadcast %cst_81 : f32 to vector<16x128xf32>
      %151 = arith.subf %149, %150 : vector<16x128xf32>
      %cst_82 = arith.constant 1.67326319 : f32
      %152 = vector.broadcast %cst_82 : f32 to vector<16x128xf32>
      %153 = arith.mulf %152, %151 : vector<16x128xf32>
      %154 = arith.select %146, %110#1, %153 : vector<16x128xi1>, vector<16x128xf32>
      %cst_83 = arith.constant 1.05070102 : f32
      %155 = vector.broadcast %cst_83 : f32 to vector<16x128xf32>
      %156 = arith.mulf %155, %154 : vector<16x128xf32>
      %157 = vector.extract_strided_slice %14 {offsets = [0, 2], sizes = [128, 1], strides = [1, 1]} : vector<128x3xbf16> to vector<128x1xbf16>
      %158 = arith.truncf %156 : vector<16x128xf32> to vector<16x128xbf16>
      %cst_84 = arith.constant dense<0.000000e+00> : vector<16x1xf32>
      %159 = tpu.matmul %158, %157, %cst_84 {dimension_numbers = #tpu.dot_dimension_numbers<[1], [0], [0], [1], [0, 0, 1, 1], [], []>} : vector<16x128xbf16>, vector<128x1xbf16>, vector<16x1xf32> -> vector<16x1xf32>
      %160 = arith.addf %144, %159 : vector<16x1xf32>
      %161 = arith.addf %arg25, %160 : vector<16x1xf32>
      %162 = vector.extract_strided_slice %161 {offsets = [0, 0], sizes = [8, 1], strides = [1, 1]} : vector<16x1xf32> to vector<8x1xf32>
      %cst_85 = arith.constant 0.000000e+00 : f32
      %163 = vector.broadcast %cst_85 : f32 to vector<8x1xf32>
      %164 = arith.subf %163, %162 : vector<8x1xf32>
      %165 = tpu.concatenate %162, %164 in 0 : vector<8x1xf32>, vector<8x1xf32> -> vector<16x1xf32>
      %cst_86 = arith.constant dense<0.000000e+00> : vector<8x1xf32>
      %166 = tpu.matmul %8, %165, %cst_86 {dimension_numbers = #tpu.dot_dimension_numbers<[1], [0], [0], [1], [0, 0, 1, 1], [], []>} : vector<8x16xf32>, vector<16x1xf32>, vector<8x1xf32> -> vector<8x1xf32>
      %167 = arith.mulf %3, %165 : vector<16x1xf32>
      %168 = math.absf %165 : vector<16x1xf32>
      %cst_87 = arith.constant 1.000000e-32 : f32
      %169 = vector.broadcast %cst_87 : f32 to vector<16x1xf32>
      %170 = arith.addf %168, %169 : vector<16x1xf32>
      %171 = math.log %170 : vector<16x1xf32>
      %cst_88 = arith.constant 8.520000e-01 : f32
      %172 = vector.broadcast %cst_88 : f32 to vector<16x1xf32>
      %173 = arith.mulf %172, %171 : vector<16x1xf32>
      %174 = math.exp %173 : vector<16x1xf32>
      %175 = arith.mulf %167, %174 : vector<16x1xf32>
      %cst_89 = arith.constant dense<0.000000e+00> : vector<8x1xf32>
      %176 = tpu.matmul %8, %175, %cst_89 {dimension_numbers = #tpu.dot_dimension_numbers<[1], [0], [0], [1], [0, 0, 1, 1], [], []>} : vector<8x16xf32>, vector<16x1xf32>, vector<8x1xf32> -> vector<8x1xf32>
      %c0_i32_90 = arith.constant 0 : i32
      %c2_i32_91 = arith.constant 2 : i32
      %177 = arith.addi %c0_i32_90, %c2_i32_91 : i32
      %c1_i32_92 = arith.constant 1 : i32
      %178 = scf.for %arg28 = %c0_i32_90 to %177 step %c1_i32_92 iter_args(%arg29 = %0) -> (vector<8x1xf32>)  : i32 {
        %cst_101 = arith.constant dense<0.000000e+00> : vector<8x1xf32>
        %198 = tpu.matmul %9, %arg29, %cst_101 {dimension_numbers = #tpu.dot_dimension_numbers<[1], [0], [0], [1], [0, 0, 1, 1], [], []>} : vector<8x8xf32>, vector<8x1xf32>, vector<8x1xf32> -> vector<8x1xf32>
        %199 = arith.subf %198, %176 : vector<8x1xf32>
        %200 = arith.mulf %199, %5 : vector<8x1xf32>
        %cst_102 = arith.constant 0.000000e+00 : f32
        %201 = vector.broadcast %cst_102 : f32 to vector<8x1xf32>
        %202 = arith.cmpf ogt, %2, %201 : vector<8x1xf32>
        %203 = arith.select %202, %0, %200 : vector<8x1xi1>, vector<8x1xf32>
        scf.yield %203 : vector<8x1xf32>
      }
      %cst_93 = arith.constant dense<0.000000e+00> : vector<16x1xf32>
      %179 = tpu.matmul %7, %178, %cst_93 {dimension_numbers = #tpu.dot_dimension_numbers<[1], [0], [0], [1], [0, 0, 1, 1], [], []>} : vector<16x8xf32>, vector<8x1xf32>, vector<16x1xf32> -> vector<16x1xf32>
      %180 = math.absf %179 : vector<16x1xf32>
      %181 = arith.mulf %180, %4 : vector<16x1xf32>
      %cst_94 = arith.constant 1.000000e-32 : f32
      %182 = vector.broadcast %cst_94 : f32 to vector<16x1xf32>
      %183 = arith.addf %181, %182 : vector<16x1xf32>
      %184 = math.log %183 : vector<16x1xf32>
      %cst_95 = arith.constant 0.539956808 : f32
      %185 = vector.broadcast %cst_95 : f32 to vector<16x1xf32>
      %186 = arith.mulf %185, %184 : vector<16x1xf32>
      %187 = math.exp %186 : vector<16x1xf32>
      %cst_96 = arith.constant 0.000000e+00 : f32
      %188 = vector.broadcast %cst_96 : f32 to vector<16x1xf32>
      %189 = arith.cmpf ogt, %179, %188 : vector<16x1xf32>
      %cst_97 = arith.constant 0.000000e+00 : f32
      %190 = vector.broadcast %cst_97 : f32 to vector<16x1xf32>
      %191 = arith.cmpf olt, %179, %190 : vector<16x1xf32>
      %cst_98 = arith.constant -1.000000e+00 : f32
      %cst_99 = arith.constant 0.000000e+00 : f32
      %192 = vector.broadcast %cst_98 : f32 to vector<16x1xf32>
      %193 = vector.broadcast %cst_99 : f32 to vector<16x1xf32>
      %194 = arith.select %191, %192, %193 : vector<16x1xi1>, vector<16x1xf32>
      %cst_100 = arith.constant 1.000000e+00 : f32
      %195 = vector.broadcast %cst_100 : f32 to vector<16x1xf32>
      %196 = arith.select %189, %195, %194 : vector<16x1xi1>, vector<16x1xf32>
      %197 = arith.mulf %196, %187 : vector<16x1xf32>
      scf.yield %166, %165, %197, %178 : vector<8x1xf32>, vector<16x1xf32>, vector<16x1xf32>, vector<8x1xf32>
    }
    %c0_39 = arith.constant 0 : index
    %c0_40 = arith.constant 0 : index
    %42 = vector.load %arg22[%c0_39, %c0_40] : memref<8x1xf32, #tpu.memory_space<vmem>>, vector<8x1xf32>
    tpu.vector_store %arg22[%c0_39, %c0_40], %41#3 {strides = array<i32>} : memref<8x1xf32, #tpu.memory_space<vmem>>, vector<8x1xf32>,
    return
  }
}

</mosaic_0001>

<llo_original>
// kernel: pi_gnn_forward.1
$region0: #{pi_gnn_forward.1}
  #allocation0 [shape = 'u32[]', space=smem, size = 0x4, offset = 0x4, fixed_abs, tag = 'smem constant byte address 0x4 - core index']
  #allocation1 [shape = 'u32[144,128]{1,0:T(1,128)}', space=vmem, size = 0x12000, scoped, tag = 'internal scratch']
  %s0 = inlined_call_operand.vmem [shape: f32[8,1], index: 0, kind: input, shape index: {}]
  %s1 = inlined_call_operand.vmem [shape: f32[8,1], index: 1, kind: input, shape index: {}]
  %s2 = inlined_call_operand.vmem [shape: f32[8,1], index: 2, kind: input, shape index: {}]
  %s3 = inlined_call_operand.vmem [shape: f32[16,1], index: 3, kind: input, shape index: {}]
  %s4 = inlined_call_operand.vmem [shape: f32[16,1], index: 4, kind: input, shape index: {}]
  %s5 = inlined_call_operand.vmem [shape: f32[8,1], index: 5, kind: input, shape index: {}]
  %s6 = inlined_call_operand.vmem [shape: f32[8,1], index: 6, kind: input, shape index: {}]
  %s7 = inlined_call_operand.vmem [shape: f32[16,8], index: 7, kind: input, shape index: {}]
  %s8 = inlined_call_operand.vmem [shape: f32[8,16], index: 8, kind: input, shape index: {}]
  %s9 = inlined_call_operand.vmem [shape: f32[8,8], index: 9, kind: input, shape index: {}]
  %s10 = inlined_call_operand.vmem [shape: bf16[16,8], index: 10, kind: input, shape index: {}]
  %s11 = inlined_call_operand.vmem [shape: bf16[16,8], index: 11, kind: input, shape index: {}]
  %s12 = inlined_call_operand.vmem [shape: f32[2,128], index: 12, kind: input, shape index: {}]
  %s13 = inlined_call_operand.vmem [shape: f32[2,128], index: 13, kind: input, shape index: {}]
  %s14 = inlined_call_operand.vmem [shape: bf16[128,3], index: 14, kind: input, shape index: {}]
  %s15 = inlined_call_operand.vmem [shape: bf16[2,128,128], index: 15, kind: input, shape index: {}]
  %s16 = inlined_call_operand.vmem [shape: bf16[2,128,128], index: 16, kind: input, shape index: {}]
  %s17 = inlined_call_operand.vmem [shape: bf16[2,128,128], index: 17, kind: input, shape index: {}]
  %s18 = inlined_call_operand.vmem [shape: bf16[2,128,128], index: 18, kind: input, shape index: {}]
  %s19 = inlined_call_operand.vmem [shape: bf16[2,128,128], index: 19, kind: input, shape index: {}]
  %s20 = inlined_call_operand.vmem [shape: bf16[2,128,128], index: 20, kind: input, shape index: {}]
  %s21 = inlined_call_operand.vmem [shape: bf16[2,128,128], index: 21, kind: input, shape index: {}]
  %s22 = inlined_call_operand.vmem [shape: f32[8,1], index: 22, kind: output, shape index: {}]
  %s23 = sld [smem:[#allocation0]]
  $region119: #{pi_gnn_forward.1} parent=0
    _
  %s25 = ssub.s32 1, %s23
  %s26 = scalar_select 0, %s25, %s23
  // Predicated region
  $region2: #{pi_gnn_forward.1} parent=0 // pred_check
    _
  $region3: #{pi_gnn_forward.1} parent=0 // pred_check_branch
    %28 = sbr.rel (0) target = $region5
  $region4: #{pi_gnn_forward.1} parent=0 // pred_region
    _
  $region5: #{pi_gnn_forward.1} parent=0 // pred_fallthru
    _
  // Predicated region
  $region6: #{pi_gnn_forward.1} parent=0 // pred_check
    _
  $region7: #{pi_gnn_forward.1} parent=0 // pred_check_branch
    %30 = sbr.rel (0) target = $region9
  $region8: #{pi_gnn_forward.1} parent=0 // pred_region
    _
  $region9: #{pi_gnn_forward.1} parent=0 // pred_fallthru
    _
  // Predicated region
  $region10: #{pi_gnn_forward.1} parent=0 // pred_check
    _
  $region11: #{pi_gnn_forward.1} parent=0 // pred_check_branch
    %32 = sbr.rel (0) target = $region13
  $region12: #{pi_gnn_forward.1} parent=0 // pred_region
    _
  $region13: #{pi_gnn_forward.1} parent=0 // pred_fallthru
    _
  // Predicated region
  $region14: #{pi_gnn_forward.1} parent=0 // pred_check
    _
  $region15: #{pi_gnn_forward.1} parent=0 // pred_check_branch
    %34 = sbr.rel (0) target = $region17
  $region16: #{pi_gnn_forward.1} parent=0 // pred_region
    _
  $region17: #{pi_gnn_forward.1} parent=0 // pred_fallthru
    _
  // Predicated region
  $region18: #{pi_gnn_forward.1} parent=0 // pred_check
    _
  $region19: #{pi_gnn_forward.1} parent=0 // pred_check_branch
    %36 = sbr.rel (0) target = $region21
  $region20: #{pi_gnn_forward.1} parent=0 // pred_region
    _
  $region21: #{pi_gnn_forward.1} parent=0 // pred_fallthru
    _
  // Predicated region
  $region22: #{pi_gnn_forward.1} parent=0 // pred_check
    _
  $region23: #{pi_gnn_forward.1} parent=0 // pred_check_branch
    %38 = sbr.rel (0) target = $region25
  $region24: #{pi_gnn_forward.1} parent=0 // pred_region
    _
  $region25: #{pi_gnn_forward.1} parent=0 // pred_fallthru
    _
  // Predicated region
  $region26: #{pi_gnn_forward.1} parent=0 // pred_check
    _
  $region27: #{pi_gnn_forward.1} parent=0 // pred_check_branch
    %40 = sbr.rel (0) target = $region29
  $region28: #{pi_gnn_forward.1} parent=0 // pred_region
    _
  $region29: #{pi_gnn_forward.1} parent=0 // pred_fallthru
    _
  // Predicated region
  $region30: #{pi_gnn_forward.1} parent=0 // pred_check
    _
  $region31: #{pi_gnn_forward.1} parent=0 // pred_check_branch
    %42 = sbr.rel (0) target = $region33
  $region32: #{pi_gnn_forward.1} parent=0 // pred_region
    _
  $region33: #{pi_gnn_forward.1} parent=0 // pred_fallthru
    _
  // Predicated region
  $region34: #{pi_gnn_forward.1} parent=0 // pred_check
    _
  $region35: #{pi_gnn_forward.1} parent=0 // pred_check_branch
    %44 = sbr.rel (0) target = $region37
  $region36: #{pi_gnn_forward.1} parent=0 // pred_region
    _
  $region37: #{pi_gnn_forward.1} parent=0 // pred_fallthru
    _
  // Predicated region
  $region38: #{pi_gnn_forward.1} parent=0 // pred_check
    _
  $region39: #{pi_gnn_forward.1} parent=0 // pred_check_branch
    %46 = sbr.rel (0) target = $region41
  $region40: #{pi_gnn_forward.1} parent=0 // pred_region
    _
  $region41: #{pi_gnn_forward.1} parent=0 // pred_fallthru
    _
  // Predicated region
  $region42: #{pi_gnn_forward.1} parent=0 // pred_check
    _
  $region43: #{pi_gnn_forward.1} parent=0 // pred_check_branch
    %48 = sbr.rel (0) target = $region45
  $region44: #{pi_gnn_forward.1} parent=0 // pred_region
    _
  $region45: #{pi_gnn_forward.1} parent=0 // pred_fallthru
    _
  // Predicated region
  $region46: #{pi_gnn_forward.1} parent=0 // pred_check
    _
  $region47: #{pi_gnn_forward.1} parent=0 // pred_check_branch
    %50 = sbr.rel (0) target = $region49
  $region48: #{pi_gnn_forward.1} parent=0 // pred_region
    _
  $region49: #{pi_gnn_forward.1} parent=0 // pred_fallthru
    _
  // Predicated region
  $region50: #{pi_gnn_forward.1} parent=0 // pred_check
    _
  $region51: #{pi_gnn_forward.1} parent=0 // pred_check_branch
    %52 = sbr.rel (0) target = $region53
  $region52: #{pi_gnn_forward.1} parent=0 // pred_region
    _
  $region53: #{pi_gnn_forward.1} parent=0 // pred_fallthru
    _
  // Predicated region
  $region54: #{pi_gnn_forward.1} parent=0 // pred_check
    _
  $region55: #{pi_gnn_forward.1} parent=0 // pred_check_branch
    %54 = sbr.rel (0) target = $region57
  $region56: #{pi_gnn_forward.1} parent=0 // pred_region
    _
  $region57: #{pi_gnn_forward.1} parent=0 // pred_fallthru
    _
  // Predicated region
  $region58: #{pi_gnn_forward.1} parent=0 // pred_check
    _
  $region59: #{pi_gnn_forward.1} parent=0 // pred_check_branch
    %56 = sbr.rel (0) target = $region61
  $region60: #{pi_gnn_forward.1} parent=0 // pred_region
    _
  $region61: #{pi_gnn_forward.1} parent=0 // pred_fallthru
    _
  // Predicated region
  $region62: #{pi_gnn_forward.1} parent=0 // pred_check
    _
  $region63: #{pi_gnn_forward.1} parent=0 // pred_check_branch
    %58 = sbr.rel (0) target = $region65
  $region64: #{pi_gnn_forward.1} parent=0 // pred_region
    _
  $region65: #{pi_gnn_forward.1} parent=0 // pred_fallthru
    _
  // Predicated region
  $region66: #{pi_gnn_forward.1} parent=0 // pred_check
    _
  $region67: #{pi_gnn_forward.1} parent=0 // pred_check_branch
    %60 = sbr.rel (0) target = $region69
  $region68: #{pi_gnn_forward.1} parent=0 // pred_region
    _
  $region69: #{pi_gnn_forward.1} parent=0 // pred_fallthru
    _
  // Predicated region
  $region70: #{pi_gnn_forward.1} parent=0 // pred_check
    _
  $region71: #{pi_gnn_forward.1} parent=0 // pred_check_branch
    %62 = sbr.rel (0) target = $region73
  $region72: #{pi_gnn_forward.1} parent=0 // pred_region
    _
  $region73: #{pi_gnn_forward.1} parent=0 // pred_fallthru
    _
  // Predicated region
  $region74: #{pi_gnn_forward.1} parent=0 // pred_check
    _
  $region75: #{pi_gnn_forward.1} parent=0 // pred_check_branch
    %64 = sbr.rel (0) target = $region77
  $region76: #{pi_gnn_forward.1} parent=0 // pred_region
    _
  $region77: #{pi_gnn_forward.1} parent=0 // pred_fallthru
    _
  // Predicated region
  $region78: #{pi_gnn_forward.1} parent=0 // pred_check
    _
  $region79: #{pi_gnn_forward.1} parent=0 // pred_check_branch
    %66 = sbr.rel (0) target = $region81
  $region80: #{pi_gnn_forward.1} parent=0 // pred_region
    _
  $region81: #{pi_gnn_forward.1} parent=0 // pred_fallthru
    _
  // Predicated region
  $region82: #{pi_gnn_forward.1} parent=0 // pred_check
    _
  $region83: #{pi_gnn_forward.1} parent=0 // pred_check_branch
    %68 = sbr.rel (0) target = $region85
  $region84: #{pi_gnn_forward.1} parent=0 // pred_region
    _
  $region85: #{pi_gnn_forward.1} parent=0 // pred_fallthru
    _
  // Predicated region
  $region86: #{pi_gnn_forward.1} parent=0 // pred_check
    _
  $region87: #{pi_gnn_forward.1} parent=0 // pred_check_branch
    %70 = sbr.rel (0) target = $region89
  $region88: #{pi_gnn_forward.1} parent=0 // pred_region
    _
  $region89: #{pi_gnn_forward.1} parent=0 // pred_fallthru
    _
  %v72 = vld [vmem:[%s0] sm:$0xff]
  %v73 = vld [vmem:[%s1] sm:$0xff]
  %v74 = vld [vmem:[%s2] sm:$0xff]
  %v75 = vld [vmem:[%s3] sm:$0xff]
  %v76 = vld [vmem:[%s3 + $0x8] sm:$0xff]
  %v77 = vld [vmem:[%s4] sm:$0xff]
  %v78 = vld [vmem:[%s4 + $0x8] sm:$0xff]
  %v79 = vld [vmem:[%s5] sm:$0xff]
  %v80 = vld [vmem:[%s6] sm:$0xff]
  %v81 = vld [vmem:[%s7] sm:$0xff]
  %v82 = vld [vmem:[%s7 + $0x8] sm:$0xff]
  %v83 = vld [vmem:[%s8] sm:$0xff]
  %v84 = vld [vmem:[%s9] sm:$0xff]
  %v85 = vld [vmem:[%s10] sm:$0xf]
  %v86 = vld [vmem:[%s10 + $0x4] sm:$0xf]
  %v87 = vld [vmem:[%s11] sm:$0xf]
  %v88 = vld [vmem:[%s11 + $0x4] sm:$0xf]
  %v89 = vld [vmem:[%s12] sm:$0x3]
  %v90 = vld [vmem:[%s13] sm:$0x3]
  %v91 = vld [vmem:[%s14] sm:$0xf]
  %v92 = vld [vmem:[%s14 + $0x4] sm:$0xf]
  %v93 = vld [vmem:[%s14 + $0x8] sm:$0xf]
  %v94 = vld [vmem:[%s14 + $0xc] sm:$0xf]
  %v95 = vld [vmem:[%s14 + $0x10] sm:$0xf]
  %v96 = vld [vmem:[%s14 + $0x14] sm:$0xf]
  %v97 = vld [vmem:[%s14 + $0x18] sm:$0xf]
  %v98 = vld [vmem:[%s14 + $0x1c] sm:$0xf]
  %v99 = vld [vmem:[%s14 + $0x20] sm:$0xf]
  %v100 = vld [vmem:[%s14 + $0x24] sm:$0xf]
  %v101 = vld [vmem:[%s14 + $0x28] sm:$0xf]
  %v102 = vld [vmem:[%s14 + $0x2c] sm:$0xf]
  %v103 = vld [vmem:[%s14 + $0x30] sm:$0xf]
  %v104 = vld [vmem:[%s14 + $0x34] sm:$0xf]
  %v105 = vld [vmem:[%s14 + $0x38] sm:$0xf]
  %v106 = vld [vmem:[%s14 + $0x3c] sm:$0xf]
  %v107 = vsub.f32 %v83, 1.0
  %v108 = vmul.f32 %v107, 1e+30
  %v109 = vlaneseq
  %v110 = vshrl.u32 %v109, 7
  %v111 = vsub.s32 0, %v110
  %v112 = vrot.slane %v108, %v111
  %114 = vbcast.lane.b32.xlu0 %v112, 256
  %v115 = vpop.permute.xlu0 %114
  %s117 = sor.u32 256, 8
  %118 = vbcast.lane.b32.xlu0 %v112, %s117
  %v119 = vpop.permute.xlu0 %118
  %v120 = vlaneseq
  %v121 = vshrl.u32 %v120, 7
  %v122 = vsub.s32 1, %v121
  %v123 = vrot.slane %v108, %v122
  %125 = vbcast.lane.b32.xlu0 %v123, 256
  %v126 = vpop.permute.xlu0 %125
  %s128 = sor.u32 256, 8
  %129 = vbcast.lane.b32.xlu0 %v123, %s128
  %v130 = vpop.permute.xlu0 %129
  %v131 = vlaneseq
  %v132 = vshrl.u32 %v131, 7
  %v133 = vsub.s32 2, %v132
  %v134 = vrot.slane %v108, %v133
  %136 = vbcast.lane.b32.xlu0 %v134, 256
  %v137 = vpop.permute.xlu0 %136
  %s139 = sor.u32 256, 8
  %140 = vbcast.lane.b32.xlu0 %v134, %s139
  %v141 = vpop.permute.xlu0 %140
  %v142 = vlaneseq
  %v143 = vshrl.u32 %v142, 7
  %v144 = vsub.s32 3, %v143
  %v145 = vrot.slane %v108, %v144
  %147 = vbcast.lane.b32.xlu0 %v145, 256
  %v148 = vpop.permute.xlu0 %147
  %s150 = sor.u32 256, 8
  %151 = vbcast.lane.b32.xlu0 %v145, %s150
  %v152 = vpop.permute.xlu0 %151
  %v153 = vlaneseq
  %v154 = vshrl.u32 %v153, 7
  %v155 = vsub.s32 4, %v154
  %v156 = vrot.slane %v108, %v155
  %158 = vbcast.lane.b32.xlu0 %v156, 256
  %v159 = vpop.permute.xlu0 %158
  %s161 = sor.u32 256, 8
  %162 = vbcast.lane.b32.xlu0 %v156, %s161
  %v163 = vpop.permute.xlu0 %162
  %v164 = vlaneseq
  %v165 = vshrl.u32 %v164, 7
  %v166 = vsub.s32 5, %v165
  %v167 = vrot.slane %v108, %v166
  %169 = vbcast.lane.b32.xlu0 %v167, 256
  %v170 = vpop.permute.xlu0 %169
  %s172 = sor.u32 256, 8
  %173 = vbcast.lane.b32.xlu0 %v167, %s172
  %v174 = vpop.permute.xlu0 %173
  %v175 = vlaneseq
  %v176 = vshrl.u32 %v175, 7
  %v177 = vsub.s32 6, %v176
  %v178 = vrot.slane %v108, %v177
  %180 = vbcast.lane.b32.xlu0 %v178, 256
  %v181 = vpop.permute.xlu0 %180
  %s183 = sor.u32 256, 8
  %184 = vbcast.lane.b32.xlu0 %v178, %s183
  %v185 = vpop.permute.xlu0 %184
  %v186 = vlaneseq
  %v187 = vshrl.u32 %v186, 7
  %v188 = vsub.s32 7, %v187
  %v189 = vrot.slane %v108, %v188
  %191 = vbcast.lane.b32.xlu0 %v189, 256
  %v192 = vpop.permute.xlu0 %191
  %s194 = sor.u32 256, 8
  %195 = vbcast.lane.b32.xlu0 %v189, %s194
  %v196 = vpop.permute.xlu0 %195
  %vm197 = vcmask 64512
  %v199 = vsel %vm197, %v81, 0
  %v202 = vsel %vm197, %v82, 0
  %204 = vmatprep.subr.mxu0 0.0
  %205 = vmatpush1.msra.mxu0 %v72
  %206 = vmatprep.subr.mxu0 0.0
  %207 = vmatpush1.msra.mxu0 0.0
  %208 = vmatprep.subr.mxu0 0.0
  %209 = vmatpush1.msra.mxu0 0.0
  %210 = vmatprep.subr.mxu0 0.0
  %211 = vmatpush1.msra.mxu0 0.0
  %212 = vmatprep.subr.mxu0 0.0
  %213 = vmatpush1.msra.mxu0 0.0
  %214 = vmatprep.subr.mxu0 0.0
  %215 = vmatpush1.msra.mxu0 0.0
  %216 = vmatprep.subr.mxu0 0.0
  %217 = vmatpush1.msra.mxu0 0.0
  %218 = vmatprep.subr.mxu0 0.0
  %219 = vmatpush1.msra.mxu0 0.0
  %220 = vmatprep.subr.mxu0 0.0
  %221 = vmatpush1.msra.mxu0 0.0
  %222 = vmatprep.subr.mxu0 0.0
  %223 = vmatpush1.msra.mxu0 0.0
  %224 = vmatprep.subr.mxu0 0.0
  %225 = vmatpush1.msra.mxu0 0.0
  %226 = vmatprep.subr.mxu0 0.0
  %227 = vmatpush1.msra.mxu0 0.0
  %228 = vmatprep.subr.mxu0 0.0
  %229 = vmatpush1.msra.mxu0 0.0
  %230 = vmatprep.subr.mxu0 0.0
  %231 = vmatpush1.msra.mxu0 0.0
  %232 = vmatprep.subr.mxu0 0.0
  %233 = vmatpush1.msra.mxu0 0.0
  %234 = vmatprep.subr.mxu0 0.0
  %235 = vmatpush1.msra.mxu0 0.0
  %236 = vmatprep.subr.mxu0 0.0
  %237 = vmatpush1.msra.mxu0 0.0
  %238 = vmatprep.subr.mxu0 0.0
  %239 = vmatpush1.msra.mxu0 0.0
  %240 = vmatprep.subr.mxu0 0.0
  %241 = vmatpush1.msra.mxu0 0.0
  %242 = vmatprep.subr.mxu0 0.0
  %243 = vmatpush1.msra.mxu0 0.0
  %244 = vmatprep.subr.mxu0 0.0
  %245 = vmatpush1.msra.mxu0 0.0
  %246 = vmatprep.subr.mxu0 0.0
  %247 = vmatpush1.msra.mxu0 0.0
  %248 = vmatprep.subr.mxu0 0.0
  %249 = vmatpush1.msra.mxu0 0.0
  %250 = vmatprep.subr.mxu0 0.0
  %251 = vmatpush1.msra.mxu0 0.0
  %252 = vmatprep.subr.mxu0 0.0
  %253 = vmatpush1.msra.mxu0 0.0
  %254 = vmatprep.subr.mxu0 0.0
  %255 = vmatpush1.msra.mxu0 0.0
  %256 = vmatprep.subr.mxu0 0.0
  %257 = vmatpush1.msra.mxu0 0.0
  %258 = vmatprep.subr.mxu0 0.0
  %259 = vmatpush1.msra.mxu0 0.0
  %260 = vmatprep.subr.mxu0 0.0
  %261 = vmatpush1.msra.mxu0 0.0
  %262 = vmatprep.subr.mxu0 0.0
  %263 = vmatpush1.msra.mxu0 0.0
  %264 = vmatprep.subr.mxu0 0.0
  %265 = vmatpush1.msra.mxu0 0.0
  %266 = vmatprep.subr.mxu0 0.0
  %267 = vmatpush1.msra.mxu0 0.0
  %268 = vmatprep.mubr.f32.mxu0 0.0
  %269 = vmatmul.mubr.f32.gmra.mrb[0].mxu0 %v199
  %v270 = vpop.f32.mrb[0].mxu0
  %v271 = vadd.f32 0.0, %v270
  %v272 = vpop.f32.mrb[0].mxu0
  %273 = vmatprep.mubr.f32.mxu0 0.0
  %274 = vmatmul.mubr.f32.gmra.mrb[0].mxu0 %v202
  %v275 = vpop.f32.mrb[0].mxu0
  %v276 = vadd.f32 0.0, %v275
  %v277 = vpop.f32.mrb[0].mxu0
  %278 = vdwg.mxu0
  %v279 = vand.u32 2147483647, %v271
  %v280 = vand.u32 2147483647, %v276
  %v281 = vmul.f32 %v279, %v77
  %v282 = vmul.f32 %v280, %v78
  %v283 = vadd.f32 %v281, 1e-32
  %v284 = vadd.f32 %v282, 1e-32
  %v285 = vlog2.pop %v283
  %v286 = vmul.f32 %v285, 0.6931472
  %v287 = vlog2.pop %v284
  %v288 = vmul.f32 %v287, 0.6931472
  %v289 = vmul.f32 %v286, 0.5399568
  %v290 = vmul.f32 %v288, 0.5399568
  %v291 = vmul.f32 %v289, 1.442695
  %v292 = vpow.pop %v291
  %v293 = vmul.f32 %v290, 1.442695
  %v294 = vpow.pop %v293
  %vm295 = vcmp.gt.f32.partialorder %v271, 0.0
  %vm296 = vcmp.gt.f32.partialorder %v276, 0.0
  %vm297 = vcmp.lt.f32.partialorder %v271, 0.0
  %vm298 = vcmp.lt.f32.partialorder %v276, 0.0
  %v299 = vsel %vm297, -1.0, 0.0
  %v300 = vsel %vm298, -1.0, 0.0
  %v301 = vsel %vm295, 1.0, %v299
  %v302 = vsel %vm296, 1.0, %v300
  %v303 = vmul.f32 %v301, %v292
  %v304 = vmul.f32 %v302, %v294
  %vm305 = vcmask 130048
  %v307 = vsel %vm305, %v83, 0
  %309 = vmatprep.subr.mxu0 0.0
  %310 = vmatpush1.msra.mxu0 %v303
  %311 = vmatprep.subr.mxu0 0.0
  %312 = vmatpush1.msra.mxu0 %v304
  %313 = vmatprep.subr.mxu0 0.0
  %314 = vmatpush1.msra.mxu0 0.0
  %315 = vmatprep.subr.mxu0 0.0
  %316 = vmatpush1.msra.mxu0 0.0
  %317 = vmatprep.subr.mxu0 0.0
  %318 = vmatpush1.msra.mxu0 0.0
  %319 = vmatprep.subr.mxu0 0.0
  %320 = vmatpush1.msra.mxu0 0.0
  %321 = vmatprep.subr.mxu0 0.0
  %322 = vmatpush1.msra.mxu0 0.0
  %323 = vmatprep.subr.mxu0 0.0
  %324 = vmatpush1.msra.mxu0 0.0
  %325 = vmatprep.subr.mxu0 0.0
  %326 = vmatpush1.msra.mxu0 0.0
  %327 = vmatprep.subr.mxu0 0.0
  %328 = vmatpush1.msra.mxu0 0.0
  %329 = vmatprep.subr.mxu0 0.0
  %330 = vmatpush1.msra.mxu0 0.0
  %331 = vmatprep.subr.mxu0 0.0
  %332 = vmatpush1.msra.mxu0 0.0
  %333 = vmatprep.subr.mxu0 0.0
  %334 = vmatpush1.msra.mxu0 0.0
  %335 = vmatprep.subr.mxu0 0.0
  %336 = vmatpush1.msra.mxu0 0.0
  %337 = vmatprep.subr.mxu0 0.0
  %338 = vmatpush1.msra.mxu0 0.0
  %339 = vmatprep.subr.mxu0 0.0
  %340 = vmatpush1.msra.mxu0 0.0
  %341 = vmatprep.subr.mxu0 0.0
  %342 = vmatpush1.msra.mxu0 0.0
  %343 = vmatprep.subr.mxu0 0.0
  %344 = vmatpush1.msra.mxu0 0.0
  %345 = vmatprep.subr.mxu0 0.0
  %346 = vmatpush1.msra.mxu0 0.0
  %347 = vmatprep.subr.mxu0 0.0
  %348 = vmatpush1.msra.mxu0 0.0
  %349 = vmatprep.subr.mxu0 0.0
  %350 = vmatpush1.msra.mxu0 0.0
  %351 = vmatprep.subr.mxu0 0.0
  %352 = vmatpush1.msra.mxu0 0.0
  %353 = vmatprep.subr.mxu0 0.0
  %354 = vmatpush1.msra.mxu0 0.0
  %355 = vmatprep.subr.mxu0 0.0
  %356 = vmatpush1.msra.mxu0 0.0
  %357 = vmatprep.subr.mxu0 0.0
  %358 = vmatpush1.msra.mxu0 0.0
  %359 = vmatprep.subr.mxu0 0.0
  %360 = vmatpush1.msra.mxu0 0.0
  %361 = vmatprep.subr.mxu0 0.0
  %362 = vmatpush1.msra.mxu0 0.0
  %363 = vmatprep.subr.mxu0 0.0
  %364 = vmatpush1.msra.mxu0 0.0
  %365 = vmatprep.subr.mxu0 0.0
  %366 = vmatpush1.msra.mxu0 0.0
  %367 = vmatprep.subr.mxu0 0.0
  %368 = vmatpush1.msra.mxu0 0.0
  %369 = vmatprep.subr.mxu0 0.0
  %370 = vmatpush1.msra.mxu0 0.0
  %371 = vmatprep.subr.mxu0 0.0
  %372 = vmatpush1.msra.mxu0 0.0
  %373 = vmatprep.mubr.f32.mxu0 0.0
  %374 = vmatmul.mubr.f32.gmra.mrb[0].mxu0 %v307
  %v375 = vpop.f32.mrb[0].mxu0
  %v376 = vadd.f32 0.0, %v375
  %v377 = vpop.f32.mrb[0].mxu0
  %378 = vdwg.mxu0
  loop: start=0, step=1, limit=2
  $region90: #{pi_gnn_forward.1} parent=0 // loop_pre_header
    _
  $region91: #{pi_gnn_forward.1} parent=0 // loop_header
    %s380 = sphi 0, %s384
    %p381 = scmp.ge.s32.totalorder %s380, 2
    %v385 = vphi %v376, %v1927
    %v386 = vphi %v303, %v1858
    %v387 = vphi %v304, %v1859
    %v388 = vphi %v303, %v2201
    %v389 = vphi %v304, %v2202
    %v390 = vphi %v72, %v2024
  $region92: #{pi_gnn_forward.1} parent=0 // loop_header_branch
    %383 = sbr.rel (%p381) target = $region96
  $region93: #{pi_gnn_forward.1} parent=0 // loop_body
    %vm391 = vcmp.gt.f32.partialorder %v385, 0.0
    %v392 = vmin.f32 %v385, 0.0
    %v393 = vmul.f32 %v392, 1.442695
    %v394 = vpow.pop %v393
    %v395 = vsub.f32 %v394, 1.0
    %v396 = vmul.f32 %v395, 1.6732632
    %v397 = vsel %vm391, %v385, %v396
    %v398 = vmul.f32 %v397, 1.050701
    %400 = vset.pattern.permute.xlu0 0
    %401 = vperm.xlu0 %400, %v398
    %v402 = vpop.permute.xlu0 %401
    %v404 = vlaneseq
    %v405 = vshrl.u32 %v404, 7
    %v406 = vsub.s32 0, %v405
    %v407 = vrot.slane %v89, %v406
    %v408 = vmul.f32 %v402, %v407
    %vm409 = vcmp.gt.f32.partialorder %v73, 0.0
    %v410 = vmin.f32 %v73, 0.0
    %v411 = vmul.f32 %v410, 1.442695
    %v412 = vpow.pop %v411
    %v413 = vsub.f32 %v412, 1.0
    %v414 = vmul.f32 %v413, 1.6732632
    %v415 = vsel %vm409, %v73, %v414
    %v416 = vmul.f32 %v415, 1.050701
    %418 = vset.pattern.permute.xlu0 0
    %419 = vperm.xlu0 %418, %v416
    %v420 = vpop.permute.xlu0 %419
    %v422 = vlaneseq
    %v423 = vshrl.u32 %v422, 7
    %v424 = vsub.s32 1, %v423
    %v425 = vrot.slane %v89, %v424
    %v426 = vmul.f32 %v420, %v425
    %v427 = vadd.f32 %v408, %v426
    %vm428 = vcmp.gt.f32.partialorder %v388, 0.0
    %vm429 = vcmp.gt.f32.partialorder %v389, 0.0
    %v430 = vmin.f32 %v388, 0.0
    %v431 = vmin.f32 %v389, 0.0
    %v432 = vmul.f32 %v430, 1.442695
    %v433 = vpow.pop %v432
    %v434 = vmul.f32 %v431, 1.442695
    %v435 = vpow.pop %v434
    %v436 = vsub.f32 %v433, 1.0
    %v437 = vsub.f32 %v435, 1.0
    %v438 = vmul.f32 %v436, 1.6732632
    %v439 = vmul.f32 %v437, 1.6732632
    %v440 = vsel %vm428, %v388, %v438
    %v441 = vsel %vm429, %v389, %v439
    %v442 = vmul.f32 %v440, 1.050701
    %v443 = vmul.f32 %v441, 1.050701
    %445 = vset.pattern.permute.xlu0 0
    %446 = vperm.xlu0 %445, %v442
    %v447 = vpop.permute.xlu0 %446
    %450 = vset.pattern.permute.xlu0 0
    %451 = vperm.xlu0 %450, %v443
    %v452 = vpop.permute.xlu0 %451
    %v454 = vlaneseq
    %v455 = vshrl.u32 %v454, 7
    %v456 = vsub.s32 0, %v455
    %v457 = vrot.slane %v90, %v456
    %v458 = vmul.f32 %v447, %v457
    %v459 = vmul.f32 %v452, %v457
    %vm460 = vcmp.gt.f32.partialorder %v386, 0.0
    %vm461 = vcmp.gt.f32.partialorder %v387, 0.0
    %v462 = vmin.f32 %v386, 0.0
    %v463 = vmin.f32 %v387, 0.0
    %v464 = vmul.f32 %v462, 1.442695
    %v465 = vpow.pop %v464
    %v466 = vmul.f32 %v463, 1.442695
    %v467 = vpow.pop %v466
    %v468 = vsub.f32 %v465, 1.0
    %v469 = vsub.f32 %v467, 1.0
    %v470 = vmul.f32 %v468, 1.6732632
    %v471 = vmul.f32 %v469, 1.6732632
    %v472 = vsel %vm460, %v386, %v470
    %v473 = vsel %vm461, %v387, %v471
    %v474 = vmul.f32 %v472, 1.050701
    %v475 = vmul.f32 %v473, 1.050701
    %477 = vset.pattern.permute.xlu0 0
    %478 = vperm.xlu0 %477, %v474
    %v479 = vpop.permute.xlu0 %478
    %482 = vset.pattern.permute.xlu0 0
    %483 = vperm.xlu0 %482, %v475
    %v484 = vpop.permute.xlu0 %483
    %v486 = vlaneseq
    %v487 = vshrl.u32 %v486, 7
    %v488 = vsub.s32 1, %v487
    %v489 = vrot.slane %v90, %v488
    %v490 = vmul.f32 %v479, %v489
    %v491 = vmul.f32 %v484, %v489
    %v492 = vadd.f32 %v458, %v490
    %v493 = vadd.f32 %v459, %v491
    loop: start=0, step=1, limit=2
    $region97: #{pi_gnn_forward.1} parent=93 // loop_pre_header
      _
    $region98: #{pi_gnn_forward.1} parent=93 // loop_header
      %s495 = sphi 0, %s499
      %p496 = scmp.ge.s32.totalorder %s495, 2
      %v500 = vphi %v427, %v1482
      %v501 = vphi %v492, %v1105
      %v502 = vphi %v493, %v1108
    $region99: #{pi_gnn_forward.1} parent=93 // loop_header_branch
      %498 = sbr.rel (%p496) target = $region103
    $region100: #{pi_gnn_forward.1} parent=93 // loop_body
      %s503 = smul.u32 %s495, 16
      %s504 = smul.addr %s503, 4
      %s505 = scalar_lea.vmem %s15, %s504
      %v506 = vld [vmem:[%s505] sm:$0xf]
      %v507 = vld [vmem:[%s505 + $0x4] sm:$0xf]
      %v508 = vld [vmem:[%s505 + $0x8] sm:$0xf]
      %v509 = vld [vmem:[%s505 + $0xc] sm:$0xf]
      %v510 = vld [vmem:[%s505 + $0x10] sm:$0xf]
      %v511 = vld [vmem:[%s505 + $0x14] sm:$0xf]
      %v512 = vld [vmem:[%s505 + $0x18] sm:$0xf]
      %v513 = vld [vmem:[%s505 + $0x1c] sm:$0xf]
      %v514 = vld [vmem:[%s505 + $0x20] sm:$0xf]
      %v515 = vld [vmem:[%s505 + $0x24] sm:$0xf]
      %v516 = vld [vmem:[%s505 + $0x28] sm:$0xf]
      %v517 = vld [vmem:[%s505 + $0x2c] sm:$0xf]
      %v518 = vld [vmem:[%s505 + $0x30] sm:$0xf]
      %v519 = vld [vmem:[%s505 + $0x34] sm:$0xf]
      %v520 = vld [vmem:[%s505 + $0x38] sm:$0xf]
      %v521 = vld [vmem:[%s505 + $0x3c] sm:$0xf]
      %s522 = smul.addr %s503, 4
      %s523 = scalar_lea.vmem %s16, %s522
      %v524 = vld [vmem:[%s523] sm:$0xf]
      %v525 = vld [vmem:[%s523 + $0x4] sm:$0xf]
      %v526 = vld [vmem:[%s523 + $0x8] sm:$0xf]
      %v527 = vld [vmem:[%s523 + $0xc] sm:$0xf]
      %v528 = vld [vmem:[%s523 + $0x10] sm:$0xf]
      %v529 = vld [vmem:[%s523 + $0x14] sm:$0xf]
      %v530 = vld [vmem:[%s523 + $0x18] sm:$0xf]
      %v531 = vld [vmem:[%s523 + $0x1c] sm:$0xf]
      %v532 = vld [vmem:[%s523 + $0x20] sm:$0xf]
      %v533 = vld [vmem:[%s523 + $0x24] sm:$0xf]
      %v534 = vld [vmem:[%s523 + $0x28] sm:$0xf]
      %v535 = vld [vmem:[%s523 + $0x2c] sm:$0xf]
      %v536 = vld [vmem:[%s523 + $0x30] sm:$0xf]
      %v537 = vld [vmem:[%s523 + $0x34] sm:$0xf]
      %v538 = vld [vmem:[%s523 + $0x38] sm:$0xf]
      %v539 = vld [vmem:[%s523 + $0x3c] sm:$0xf]
      %s540 = smul.addr %s503, 4
      %s541 = scalar_lea.vmem %s17, %s540
      %v542 = vld [vmem:[%s541] sm:$0xf]
      %v543 = vld [vmem:[%s541 + $0x4] sm:$0xf]
      %v544 = vld [vmem:[%s541 + $0x8] sm:$0xf]
      %v545 = vld [vmem:[%s541 + $0xc] sm:$0xf]
      %v546 = vld [vmem:[%s541 + $0x10] sm:$0xf]
      %v547 = vld [vmem:[%s541 + $0x14] sm:$0xf]
      %v548 = vld [vmem:[%s541 + $0x18] sm:$0xf]
      %v549 = vld [vmem:[%s541 + $0x1c] sm:$0xf]
      %v550 = vld [vmem:[%s541 + $0x20] sm:$0xf]
      %v551 = vld [vmem:[%s541 + $0x24] sm:$0xf]
      %v552 = vld [vmem:[%s541 + $0x28] sm:$0xf]
      %v553 = vld [vmem:[%s541 + $0x2c] sm:$0xf]
      %v554 = vld [vmem:[%s541 + $0x30] sm:$0xf]
      %v555 = vld [vmem:[%s541 + $0x34] sm:$0xf]
      %v556 = vld [vmem:[%s541 + $0x38] sm:$0xf]
      %v557 = vld [vmem:[%s541 + $0x3c] sm:$0xf]
      %s558 = smul.addr %s503, 4
      %s559 = scalar_lea.vmem %s18, %s558
      %v560 = vld [vmem:[%s559] sm:$0xf]
      %v561 = vld [vmem:[%s559 + $0x4] sm:$0xf]
      %v562 = vld [vmem:[%s559 + $0x8] sm:$0xf]
      %v563 = vld [vmem:[%s559 + $0xc] sm:$0xf]
      %v564 = vld [vmem:[%s559 + $0x10] sm:$0xf]
      %v565 = vld [vmem:[%s559 + $0x14] sm:$0xf]
      %v566 = vld [vmem:[%s559 + $0x18] sm:$0xf]
      %v567 = vld [vmem:[%s559 + $0x1c] sm:$0xf]
      %v568 = vld [vmem:[%s559 + $0x20] sm:$0xf]
      %v569 = vld [vmem:[%s559 + $0x24] sm:$0xf]
      %v570 = vld [vmem:[%s559 + $0x28] sm:$0xf]
      %v571 = vld [vmem:[%s559 + $0x2c] sm:$0xf]
      %v572 = vld [vmem:[%s559 + $0x30] sm:$0xf]
      %v573 = vld [vmem:[%s559 + $0x34] sm:$0xf]
      %v574 = vld [vmem:[%s559 + $0x38] sm:$0xf]
      %v575 = vld [vmem:[%s559 + $0x3c] sm:$0xf]
      %s576 = smul.addr %s503, 4
      %s577 = scalar_lea.vmem %s19, %s576
      %v578 = vld [vmem:[%s577] sm:$0xf]
      %v579 = vld [vmem:[%s577 + $0x4] sm:$0xf]
      %v580 = vld [vmem:[%s577 + $0x8] sm:$0xf]
      %v581 = vld [vmem:[%s577 + $0xc] sm:$0xf]
      %v582 = vld [vmem:[%s577 + $0x10] sm:$0xf]
      %v583 = vld [vmem:[%s577 + $0x14] sm:$0xf]
      %v584 = vld [vmem:[%s577 + $0x18] sm:$0xf]
      %v585 = vld [vmem:[%s577 + $0x1c] sm:$0xf]
      %v586 = vld [vmem:[%s577 + $0x20] sm:$0xf]
      %v587 = vld [vmem:[%s577 + $0x24] sm:$0xf]
      %v588 = vld [vmem:[%s577 + $0x28] sm:$0xf]
      %v589 = vld [vmem:[%s577 + $0x2c] sm:$0xf]
      %v590 = vld [vmem:[%s577 + $0x30] sm:$0xf]
      %v591 = vld [vmem:[%s577 + $0x34] sm:$0xf]
      %v592 = vld [vmem:[%s577 + $0x38] sm:$0xf]
      %v593 = vld [vmem:[%s577 + $0x3c] sm:$0xf]
      %s594 = smul.addr %s503, 4
      %s595 = scalar_lea.vmem %s20, %s594
      %v596 = vld [vmem:[%s595] sm:$0xf]
      %v597 = vld [vmem:[%s595 + $0x4] sm:$0xf]
      %v598 = vld [vmem:[%s595 + $0x8] sm:$0xf]
      %v599 = vld [vmem:[%s595 + $0xc] sm:$0xf]
      %v600 = vld [vmem:[%s595 + $0x10] sm:$0xf]
      %v601 = vld [vmem:[%s595 + $0x14] sm:$0xf]
      %v602 = vld [vmem:[%s595 + $0x18] sm:$0xf]
      %v603 = vld [vmem:[%s595 + $0x1c] sm:$0xf]
      %v604 = vld [vmem:[%s595 + $0x20] sm:$0xf]
      %v605 = vld [vmem:[%s595 + $0x24] sm:$0xf]
      %v606 = vld [vmem:[%s595 + $0x28] sm:$0xf]
      %v607 = vld [vmem:[%s595 + $0x2c] sm:$0xf]
      %v608 = vld [vmem:[%s595 + $0x30] sm:$0xf]
      %v609 = vld [vmem:[%s595 + $0x34] sm:$0xf]
      %v610 = vld [vmem:[%s595 + $0x38] sm:$0xf]
      %v611 = vld [vmem:[%s595 + $0x3c] sm:$0xf]
      %s612 = smul.addr %s503, 4
      %s613 = scalar_lea.vmem %s21, %s612
      %v614 = vld [vmem:[%s613] sm:$0xf]
      %v615 = vld [vmem:[%s613 + $0x4] sm:$0xf]
      %v616 = vld [vmem:[%s613 + $0x8] sm:$0xf]
      %v617 = vld [vmem:[%s613 + $0xc] sm:$0xf]
      %v618 = vld [vmem:[%s613 + $0x10] sm:$0xf]
      %v619 = vld [vmem:[%s613 + $0x14] sm:$0xf]
      %v620 = vld [vmem:[%s613 + $0x18] sm:$0xf]
      %v621 = vld [vmem:[%s613 + $0x1c] sm:$0xf]
      %v622 = vld [vmem:[%s613 + $0x20] sm:$0xf]
      %v623 = vld [vmem:[%s613 + $0x24] sm:$0xf]
      %v624 = vld [vmem:[%s613 + $0x28] sm:$0xf]
      %v625 = vld [vmem:[%s613 + $0x2c] sm:$0xf]
      %v626 = vld [vmem:[%s613 + $0x30] sm:$0xf]
      %v627 = vld [vmem:[%s613 + $0x34] sm:$0xf]
      %v628 = vld [vmem:[%s613 + $0x38] sm:$0xf]
      %v629 = vld [vmem:[%s613 + $0x3c] sm:$0xf]
      %v630 = vpack.c.bf16 %v500, %v500
      %v633 = vunpack.c.l.b16 %v85
      %v634 = vunpack.c.l.b16 %v86
      %v635 = vpack.c.b16 %v634, %v633
      %v637 = vsel %vm197, %v635, 0
      %vm639 = vcmask 1043456
      %v641 = vsel %vm639, %v630, 0
      %643 = vmatprep.subr.bf16.mxu0 0
      %644 = vmatpush1.bf16.msra.mxu0 %v641
      %645 = vmatprep.subr.bf16.mxu0 0
      %646 = vmatpush1.bf16.msra.mxu0 0
      %647 = vmatprep.subr.bf16.mxu0 0
      %648 = vmatpush1.bf16.msra.mxu0 0
      %649 = vmatprep.subr.bf16.mxu0 0
      %650 = vmatpush1.bf16.msra.mxu0 0
      %651 = vmatprep.subr.bf16.mxu0 0
      %652 = vmatpush1.bf16.msra.mxu0 0
      %653 = vmatprep.subr.bf16.mxu0 0
      %654 = vmatpush1.bf16.msra.mxu0 0
      %655 = vmatprep.subr.bf16.mxu0 0
      %656 = vmatpush1.bf16.msra.mxu0 0
      %657 = vmatprep.subr.bf16.mxu0 0
      %658 = vmatpush1.bf16.msra.mxu0 0
      %659 = vmatprep.subr.bf16.mxu0 0
      %660 = vmatpush1.bf16.msra.mxu0 0
      %661 = vmatprep.subr.bf16.mxu0 0
      %662 = vmatpush1.bf16.msra.mxu0 0
      %663 = vmatprep.subr.bf16.mxu0 0
      %664 = vmatpush1.bf16.msra.mxu0 0
      %665 = vmatprep.subr.bf16.mxu0 0
      %666 = vmatpush1.bf16.msra.mxu0 0
      %667 = vmatprep.subr.bf16.mxu0 0
      %668 = vmatpush1.bf16.msra.mxu0 0
      %669 = vmatprep.subr.bf16.mxu0 0
      %670 = vmatpush1.bf16.msra.mxu0 0
      %671 = vmatprep.subr.bf16.mxu0 0
      %672 = vmatpush1.bf16.msra.mxu0 0
      %673 = vmatprep.subr.bf16.mxu0 0
      %674 = vmatpush1.bf16.msra.mxu0 0
      %675 = vmatprep.mubr.bf16.mxu0 0
      %676 = vmatmul.mubr.bf16.gmra.mrb[0].mxu0 %v637
      %v677 = vpop.f32.mrb[0].mxu0
      %v678 = vadd.f32 0.0, %v677
      %v679 = vpop.f32.mrb[0].mxu0
      %v680 = vpop.f32.mrb[0].mxu0
      %v681 = vadd.f32 0.0, %v680
      %v682 = vpop.f32.mrb[0].mxu0
      %683 = vdwg.mxu0
      %v686 = vunpack.c.l.b16 %v87
      %v687 = vunpack.c.l.b16 %v88
      %v688 = vpack.c.b16 %v687, %v686
      %v690 = vsel %vm197, %v688, 0
      %692 = vmatprep.subr.bf16.mxu0 0
      %693 = vmatpush1.bf16.msra.mxu0 %v641
      %694 = vmatprep.subr.bf16.mxu0 0
      %695 = vmatpush1.bf16.msra.mxu0 0
      %696 = vmatprep.subr.bf16.mxu0 0
      %697 = vmatpush1.bf16.msra.mxu0 0
      %698 = vmatprep.subr.bf16.mxu0 0
      %699 = vmatpush1.bf16.msra.mxu0 0
      %700 = vmatprep.subr.bf16.mxu0 0
      %701 = vmatpush1.bf16.msra.mxu0 0
      %702 = vmatprep.subr.bf16.mxu0 0
      %703 = vmatpush1.bf16.msra.mxu0 0
      %704 = vmatprep.subr.bf16.mxu0 0
      %705 = vmatpush1.bf16.msra.mxu0 0
      %706 = vmatprep.subr.bf16.mxu0 0
      %707 = vmatpush1.bf16.msra.mxu0 0
      %708 = vmatprep.subr.bf16.mxu0 0
      %709 = vmatpush1.bf16.msra.mxu0 0
      %710 = vmatprep.subr.bf16.mxu0 0
      %711 = vmatpush1.bf16.msra.mxu0 0
      %712 = vmatprep.subr.bf16.mxu0 0
      %713 = vmatpush1.bf16.msra.mxu0 0
      %714 = vmatprep.subr.bf16.mxu0 0
      %715 = vmatpush1.bf16.msra.mxu0 0
      %716 = vmatprep.subr.bf16.mxu0 0
      %717 = vmatpush1.bf16.msra.mxu0 0
      %718 = vmatprep.subr.bf16.mxu0 0
      %719 = vmatpush1.bf16.msra.mxu0 0
      %720 = vmatprep.subr.bf16.mxu0 0
      %721 = vmatpush1.bf16.msra.mxu0 0
      %722 = vmatprep.subr.bf16.mxu0 0
      %723 = vmatpush1.bf16.msra.mxu0 0
      %724 = vmatprep.mubr.bf16.mxu0 0
      %725 = vmatmul.mubr.bf16.gmra.mrb[0].mxu0 %v690
      %v726 = vpop.f32.mrb[0].mxu0
      %v727 = vadd.f32 0.0, %v726
      %v728 = vpop.f32.mrb[0].mxu0
      %v729 = vpop.f32.mrb[0].mxu0
      %v730 = vadd.f32 0.0, %v729
      %v731 = vpop.f32.mrb[0].mxu0
      %732 = vdwg.mxu0
      %v733 = vpack.c.bf16 %v681, %v678
      %v734 = vpack.c.bf16 %v730, %v727
      %v751 = vunpack.c.l.b16 %v524
      %v752 = vunpack.c.l.b16 %v525
      %v753 = vunpack.c.l.b16 %v526
      %v754 = vunpack.c.l.b16 %v527
      %v755 = vunpack.c.l.b16 %v528
      %v756 = vunpack.c.l.b16 %v529
      %v757 = vunpack.c.l.b16 %v530
      %v758 = vunpack.c.l.b16 %v531
      %v759 = vunpack.c.l.b16 %v532
      %v760 = vunpack.c.l.b16 %v533
      %v761 = vunpack.c.l.b16 %v534
      %v762 = vunpack.c.l.b16 %v535
      %v763 = vunpack.c.l.b16 %v536
      %v764 = vunpack.c.l.b16 %v537
      %v765 = vunpack.c.l.b16 %v538
      %v766 = vunpack.c.l.b16 %v539
      %v767 = vpack.c.b16 %v752, %v751
      %v768 = vpack.c.b16 %v754, %v753
      %v769 = vpack.c.b16 %v756, %v755
      %v770 = vpack.c.b16 %v758, %v757
      %v771 = vpack.c.b16 %v760, %v759
      %v772 = vpack.c.b16 %v762, %v761
      %v773 = vpack.c.b16 %v764, %v763
      %v774 = vpack.c.b16 %v766, %v765
      %783 = vmatprep.subr.bf16.mxu0 0
      %784 = vmatpush1.bf16.msra.mxu0 %v767
      %785 = vmatprep.subr.bf16.mxu0 0
      %786 = vmatpush1.bf16.msra.mxu0 %v768
      %787 = vmatprep.subr.bf16.mxu0 0
      %788 = vmatpush1.bf16.msra.mxu0 %v769
      %789 = vmatprep.subr.bf16.mxu0 0
      %790 = vmatpush1.bf16.msra.mxu0 %v770
      %791 = vmatprep.subr.bf16.mxu0 0
      %792 = vmatpush1.bf16.msra.mxu0 %v771
      %793 = vmatprep.subr.bf16.mxu0 0
      %794 = vmatpush1.bf16.msra.mxu0 %v772
      %795 = vmatprep.subr.bf16.mxu0 0
      %796 = vmatpush1.bf16.msra.mxu0 %v773
      %797 = vmatprep.subr.bf16.mxu0 0
      %798 = vmatpush1.bf16.msra.mxu0 %v774
      %799 = vmatprep.subr.bf16.mxu0 0
      %800 = vmatpush1.bf16.msra.mxu0 0
      %801 = vmatprep.subr.bf16.mxu0 0
      %802 = vmatpush1.bf16.msra.mxu0 0
      %803 = vmatprep.subr.bf16.mxu0 0
      %804 = vmatpush1.bf16.msra.mxu0 0
      %805 = vmatprep.subr.bf16.mxu0 0
      %806 = vmatpush1.bf16.msra.mxu0 0
      %807 = vmatprep.subr.bf16.mxu0 0
      %808 = vmatpush1.bf16.msra.mxu0 0
      %809 = vmatprep.subr.bf16.mxu0 0
      %810 = vmatpush1.bf16.msra.mxu0 0
      %811 = vmatprep.subr.bf16.mxu0 0
      %812 = vmatpush1.bf16.msra.mxu0 0
      %813 = vmatprep.subr.bf16.mxu0 0
      %814 = vmatpush1.bf16.msra.mxu0 0
      %815 = vmatprep.mubr.bf16.mxu0 0
      %816 = vmatmul.mubr.bf16.gmra.mrb[0].mxu0 %v734
      %v817 = vpop.f32.mrb[0].mxu0
      %v818 = vadd.f32 0.0, %v817
      %v819 = vpop.f32.mrb[0].mxu0
      %v820 = vpop.f32.mrb[0].mxu0
      %v821 = vadd.f32 0.0, %v820
      %v822 = vpop.f32.mrb[0].mxu0
      %823 = vdwg.mxu0
      %v840 = vunpack.c.l.b16 %v506
      %v841 = vunpack.c.l.b16 %v507
      %v842 = vunpack.c.l.b16 %v508
      %v843 = vunpack.c.l.b16 %v509
      %v844 = vunpack.c.l.b16 %v510
      %v845 = vunpack.c.l.b16 %v511
      %v846 = vunpack.c.l.b16 %v512
      %v847 = vunpack.c.l.b16 %v513
      %v848 = vunpack.c.l.b16 %v514
      %v849 = vunpack.c.l.b16 %v515
      %v850 = vunpack.c.l.b16 %v516
      %v851 = vunpack.c.l.b16 %v517
      %v852 = vunpack.c.l.b16 %v518
      %v853 = vunpack.c.l.b16 %v519
      %v854 = vunpack.c.l.b16 %v520
      %v855 = vunpack.c.l.b16 %v521
      %v856 = vpack.c.b16 %v841, %v840
      %v857 = vpack.c.b16 %v843, %v842
      %v858 = vpack.c.b16 %v845, %v844
      %v859 = vpack.c.b16 %v847, %v846
      %v860 = vpack.c.b16 %v849, %v848
      %v861 = vpack.c.b16 %v851, %v850
      %v862 = vpack.c.b16 %v853, %v852
      %v863 = vpack.c.b16 %v855, %v854
      %872 = vmatprep.subr.bf16.mxu0 0
      %873 = vmatpush1.bf16.msra.mxu0 %v856
      %874 = vmatprep.subr.bf16.mxu0 0
      %875 = vmatpush1.bf16.msra.mxu0 %v857
      %876 = vmatprep.subr.bf16.mxu0 0
      %877 = vmatpush1.bf16.msra.mxu0 %v858
      %878 = vmatprep.subr.bf16.mxu0 0
      %879 = vmatpush1.bf16.msra.mxu0 %v859
      %880 = vmatprep.subr.bf16.mxu0 0
      %881 = vmatpush1.bf16.msra.mxu0 %v860
      %882 = vmatprep.subr.bf16.mxu0 0
      %883 = vmatpush1.bf16.msra.mxu0 %v861
      %884 = vmatprep.subr.bf16.mxu0 0
      %885 = vmatpush1.bf16.msra.mxu0 %v862
      %886 = vmatprep.subr.bf16.mxu0 0
      %887 = vmatpush1.bf16.msra.mxu0 %v863
      %888 = vmatprep.subr.bf16.mxu0 0
      %889 = vmatpush1.bf16.msra.mxu0 0
      %890 = vmatprep.subr.bf16.mxu0 0
      %891 = vmatpush1.bf16.msra.mxu0 0
      %892 = vmatprep.subr.bf16.mxu0 0
      %893 = vmatpush1.bf16.msra.mxu0 0
      %894 = vmatprep.subr.bf16.mxu0 0
      %895 = vmatpush1.bf16.msra.mxu0 0
      %896 = vmatprep.subr.bf16.mxu0 0
      %897 = vmatpush1.bf16.msra.mxu0 0
      %898 = vmatprep.subr.bf16.mxu0 0
      %899 = vmatpush1.bf16.msra.mxu0 0
      %900 = vmatprep.subr.bf16.mxu0 0
      %901 = vmatpush1.bf16.msra.mxu0 0
      %902 = vmatprep.subr.bf16.mxu0 0
      %903 = vmatpush1.bf16.msra.mxu0 0
      %904 = vmatprep.mubr.bf16.mxu0 0
      %905 = vmatmul.mubr.bf16.gmra.mrb[0].mxu0 %v733
      %v906 = vpop.f32.mrb[0].mxu0
      %v907 = vadd.f32 %v818, %v906
      %v908 = vpop.f32.mrb[0].mxu0
      %v909 = vpop.f32.mrb[0].mxu0
      %v910 = vadd.f32 %v821, %v909
      %v911 = vpop.f32.mrb[0].mxu0
      %912 = vdwg.mxu0
      %v913 = vpack.c.bf16 %v502, %v501
      %v930 = vunpack.c.l.b16 %v542
      %v931 = vunpack.c.l.b16 %v543
      %v932 = vunpack.c.l.b16 %v544
      %v933 = vunpack.c.l.b16 %v545
      %v934 = vunpack.c.l.b16 %v546
      %v935 = vunpack.c.l.b16 %v547
      %v936 = vunpack.c.l.b16 %v548
      %v937 = vunpack.c.l.b16 %v549
      %v938 = vunpack.c.l.b16 %v550
      %v939 = vunpack.c.l.b16 %v551
      %v940 = vunpack.c.l.b16 %v552
      %v941 = vunpack.c.l.b16 %v553
      %v942 = vunpack.c.l.b16 %v554
      %v943 = vunpack.c.l.b16 %v555
      %v944 = vunpack.c.l.b16 %v556
      %v945 = vunpack.c.l.b16 %v557
      %v946 = vpack.c.b16 %v931, %v930
      %v947 = vpack.c.b16 %v933, %v932
      %v948 = vpack.c.b16 %v935, %v934
      %v949 = vpack.c.b16 %v937, %v936
      %v950 = vpack.c.b16 %v939, %v938
      %v951 = vpack.c.b16 %v941, %v940
      %v952 = vpack.c.b16 %v943, %v942
      %v953 = vpack.c.b16 %v945, %v944
      %962 = vmatprep.subr.bf16.mxu0 0
      %963 = vmatpush1.bf16.msra.mxu0 %v946
      %964 = vmatprep.subr.bf16.mxu0 0
      %965 = vmatpush1.bf16.msra.mxu0 %v947
      %966 = vmatprep.subr.bf16.mxu0 0
      %967 = vmatpush1.bf16.msra.mxu0 %v948
      %968 = vmatprep.subr.bf16.mxu0 0
      %969 = vmatpush1.bf16.msra.mxu0 %v949
      %970 = vmatprep.subr.bf16.mxu0 0
      %971 = vmatpush1.bf16.msra.mxu0 %v950
      %972 = vmatprep.subr.bf16.mxu0 0
      %973 = vmatpush1.bf16.msra.mxu0 %v951
      %974 = vmatprep.subr.bf16.mxu0 0
      %975 = vmatpush1.bf16.msra.mxu0 %v952
      %976 = vmatprep.subr.bf16.mxu0 0
      %977 = vmatpush1.bf16.msra.mxu0 %v953
      %978 = vmatprep.subr.bf16.mxu0 0
      %979 = vmatpush1.bf16.msra.mxu0 0
      %980 = vmatprep.subr.bf16.mxu0 0
      %981 = vmatpush1.bf16.msra.mxu0 0
      %982 = vmatprep.subr.bf16.mxu0 0
      %983 = vmatpush1.bf16.msra.mxu0 0
      %984 = vmatprep.subr.bf16.mxu0 0
      %985 = vmatpush1.bf16.msra.mxu0 0
      %986 = vmatprep.subr.bf16.mxu0 0
      %987 = vmatpush1.bf16.msra.mxu0 0
      %988 = vmatprep.subr.bf16.mxu0 0
      %989 = vmatpush1.bf16.msra.mxu0 0
      %990 = vmatprep.subr.bf16.mxu0 0
      %991 = vmatpush1.bf16.msra.mxu0 0
      %992 = vmatprep.subr.bf16.mxu0 0
      %993 = vmatpush1.bf16.msra.mxu0 0
      %994 = vmatprep.mubr.bf16.mxu0 0
      %995 = vmatmul.mubr.bf16.gmra.mrb[0].mxu0 %v913
      %v996 = vpop.f32.mrb[0].mxu0
      %v997 = vadd.f32 0.0, %v996
      %v998 = vpop.f32.mrb[0].mxu0
      %v999 = vpop.f32.mrb[0].mxu0
      %v1000 = vadd.f32 0.0, %v999
      %v1001 = vpop.f32.mrb[0].mxu0
      %1002 = vdwg.mxu0
      %v1003 = vadd.f32 %v907, %v997
      %v1004 = vadd.f32 %v910, %v1000
      %vm1005 = vcmp.gt.f32.partialorder %v1003, 0.0
      %vm1006 = vcmp.gt.f32.partialorder %v1004, 0.0
      %v1007 = vmin.f32 %v1003, 0.0
      %v1008 = vmin.f32 %v1004, 0.0
      %v1009 = vmul.f32 %v1007, 1.442695
      %v1010 = vpow.pop %v1009
      %v1011 = vmul.f32 %v1008, 1.442695
      %v1012 = vpow.pop %v1011
      %v1013 = vsub.f32 %v1010, 1.0
      %v1014 = vsub.f32 %v1012, 1.0
      %v1015 = vmul.f32 %v1013, 1.6732632
      %v1016 = vmul.f32 %v1014, 1.6732632
      %v1017 = vsel %vm1005, %v1003, %v1015
      %v1018 = vsel %vm1006, %v1004, %v1016
      %v1019 = vmul.f32 %v1017, 1.050701
      %v1020 = vmul.f32 %v1018, 1.050701
      %v1021 = vpack.c.bf16 %v1020, %v1019
      %v1038 = vunpack.c.l.b16 %v560
      %v1039 = vunpack.c.l.b16 %v561
      %v1040 = vunpack.c.l.b16 %v562
      %v1041 = vunpack.c.l.b16 %v563
      %v1042 = vunpack.c.l.b16 %v564
      %v1043 = vunpack.c.l.b16 %v565
      %v1044 = vunpack.c.l.b16 %v566
      %v1045 = vunpack.c.l.b16 %v567
      %v1046 = vunpack.c.l.b16 %v568
      %v1047 = vunpack.c.l.b16 %v569
      %v1048 = vunpack.c.l.b16 %v570
      %v1049 = vunpack.c.l.b16 %v571
      %v1050 = vunpack.c.l.b16 %v572
      %v1051 = vunpack.c.l.b16 %v573
      %v1052 = vunpack.c.l.b16 %v574
      %v1053 = vunpack.c.l.b16 %v575
      %v1054 = vpack.c.b16 %v1039, %v1038
      %v1055 = vpack.c.b16 %v1041, %v1040
      %v1056 = vpack.c.b16 %v1043, %v1042
      %v1057 = vpack.c.b16 %v1045, %v1044
      %v1058 = vpack.c.b16 %v1047, %v1046
      %v1059 = vpack.c.b16 %v1049, %v1048
      %v1060 = vpack.c.b16 %v1051, %v1050
      %v1061 = vpack.c.b16 %v1053, %v1052
      %1070 = vmatprep.subr.bf16.mxu0 0
      %1071 = vmatpush1.bf16.msra.mxu0 %v1054
      %1072 = vmatprep.subr.bf16.mxu0 0
      %1073 = vmatpush1.bf16.msra.mxu0 %v1055
      %1074 = vmatprep.subr.bf16.mxu0 0
      %1075 = vmatpush1.bf16.msra.mxu0 %v1056
      %1076 = vmatprep.subr.bf16.mxu0 0
      %1077 = vmatpush1.bf16.msra.mxu0 %v1057
      %1078 = vmatprep.subr.bf16.mxu0 0
      %1079 = vmatpush1.bf16.msra.mxu0 %v1058
      %1080 = vmatprep.subr.bf16.mxu0 0
      %1081 = vmatpush1.bf16.msra.mxu0 %v1059
      %1082 = vmatprep.subr.bf16.mxu0 0
      %1083 = vmatpush1.bf16.msra.mxu0 %v1060
      %1084 = vmatprep.subr.bf16.mxu0 0
      %1085 = vmatpush1.bf16.msra.mxu0 %v1061
      %1086 = vmatprep.subr.bf16.mxu0 0
      %1087 = vmatpush1.bf16.msra.mxu0 0
      %1088 = vmatprep.subr.bf16.mxu0 0
      %1089 = vmatpush1.bf16.msra.mxu0 0
      %1090 = vmatprep.subr.bf16.mxu0 0
      %1091 = vmatpush1.bf16.msra.mxu0 0
      %1092 = vmatprep.subr.bf16.mxu0 0
      %1093 = vmatpush1.bf16.msra.mxu0 0
      %1094 = vmatprep.subr.bf16.mxu0 0
      %1095 = vmatpush1.bf16.msra.mxu0 0
      %1096 = vmatprep.subr.bf16.mxu0 0
      %1097 = vmatpush1.bf16.msra.mxu0 0
      %1098 = vmatprep.subr.bf16.mxu0 0
      %1099 = vmatpush1.bf16.msra.mxu0 0
      %1100 = vmatprep.subr.bf16.mxu0 0
      %1101 = vmatpush1.bf16.msra.mxu0 0
      %1102 = vmatprep.mubr.bf16.mxu0 0
      %1103 = vmatmul.mubr.bf16.gmra.mrb[0].mxu0 %v1021
      %v1104 = vpop.f32.mrb[0].mxu0
      %v1105 = vadd.f32 0.0, %v1104
      %v1106 = vpop.f32.mrb[0].mxu0
      %v1107 = vpop.f32.mrb[0].mxu0
      %v1108 = vadd.f32 0.0, %v1107
      %v1109 = vpop.f32.mrb[0].mxu0
      %1110 = vdwg.mxu0
      %v1111 = vadd.f32 %v1105, %v115
      %v1112 = vadd.f32 %v1108, %v119
      %v1113 = vadd.f32 %v1105, %v126
      %v1114 = vadd.f32 %v1108, %v130
      %v1115 = vadd.f32 %v1105, %v137
      %v1116 = vadd.f32 %v1108, %v141
      %v1117 = vadd.f32 %v1105, %v148
      %v1118 = vadd.f32 %v1108, %v152
      %v1119 = vadd.f32 %v1105, %v159
      %v1120 = vadd.f32 %v1108, %v163
      %v1121 = vadd.f32 %v1105, %v170
      %v1122 = vadd.f32 %v1108, %v174
      %v1123 = vadd.f32 %v1105, %v181
      %v1124 = vadd.f32 %v1108, %v185
      %v1125 = vadd.f32 %v1105, %v192
      %v1126 = vadd.f32 %v1108, %v196
      %v1127 = vmax.f32 %v1111, %v1112
      %v1128 = vrot.slane %v1127, 4
      %v1129 = vmax.f32 %v1127, %v1128
      %v1130 = vrot.slane %v1129, 2
      %v1131 = vmax.f32 %v1129, %v1130
      %v1132 = vrot.slane %v1131, 1
      %v1133 = vmax.f32 %v1131, %v1132
      %v1134 = vmax.f32 %v1113, %v1114
      %v1135 = vrot.slane %v1134, 4
      %v1136 = vmax.f32 %v1134, %v1135
      %v1137 = vrot.slane %v1136, 2
      %v1138 = vmax.f32 %v1136, %v1137
      %v1139 = vrot.slane %v1138, 1
      %v1140 = vmax.f32 %v1138, %v1139
      %v1141 = vmax.f32 %v1115, %v1116
      %v1142 = vrot.slane %v1141, 4
      %v1143 = vmax.f32 %v1141, %v1142
      %v1144 = vrot.slane %v1143, 2
      %v1145 = vmax.f32 %v1143, %v1144
      %v1146 = vrot.slane %v1145, 1
      %v1147 = vmax.f32 %v1145, %v1146
      %v1148 = vmax.f32 %v1117, %v1118
      %v1149 = vrot.slane %v1148, 4
      %v1150 = vmax.f32 %v1148, %v1149
      %v1151 = vrot.slane %v1150, 2
      %v1152 = vmax.f32 %v1150, %v1151
      %v1153 = vrot.slane %v1152, 1
      %v1154 = vmax.f32 %v1152, %v1153
      %v1155 = vmax.f32 %v1119, %v1120
      %v1156 = vrot.slane %v1155, 4
      %v1157 = vmax.f32 %v1155, %v1156
      %v1158 = vrot.slane %v1157, 2
      %v1159 = vmax.f32 %v1157, %v1158
      %v1160 = vrot.slane %v1159, 1
      %v1161 = vmax.f32 %v1159, %v1160
      %v1162 = vmax.f32 %v1121, %v1122
      %v1163 = vrot.slane %v1162, 4
      %v1164 = vmax.f32 %v1162, %v1163
      %v1165 = vrot.slane %v1164, 2
      %v1166 = vmax.f32 %v1164, %v1165
      %v1167 = vrot.slane %v1166, 1
      %v1168 = vmax.f32 %v1166, %v1167
      %v1169 = vmax.f32 %v1123, %v1124
      %v1170 = vrot.slane %v1169, 4
      %v1171 = vmax.f32 %v1169, %v1170
      %v1172 = vrot.slane %v1171, 2
      %v1173 = vmax.f32 %v1171, %v1172
      %v1174 = vrot.slane %v1173, 1
      %v1175 = vmax.f32 %v1173, %v1174
      %v1176 = vmax.f32 %v1125, %v1126
      %v1177 = vrot.slane %v1176, 4
      %v1178 = vmax.f32 %v1176, %v1177
      %v1179 = vrot.slane %v1178, 2
      %v1180 = vmax.f32 %v1178, %v1179
      %v1181 = vrot.slane %v1180, 1
      %v1182 = vmax.f32 %v1180, %v1181
      %vm1183 = vcmp.gt.f32.partialorder %v80, 0.0
      %v1184 = vsel %vm1183, 1, 0
      %1185 = vset.pattern.permute.xlu0 0
      %1186 = vperm.xlu0 %1185, %v1184
      %v1187 = vpop.permute.xlu0 %1186
      %vm1188 = vcmp.eq.s32.totalorder %v1187, 1
      %vm1197 = vcmask 1041409
      %v1198 = vsel %vm1197, %v1140, %v1133
      %vm1199 = vcmask 1042434
      %v1200 = vsel %vm1199, %v1147, %v1198
      %vm1201 = vcmask 1043459
      %v1202 = vsel %vm1201, %v1154, %v1200
      %vm1203 = vcmask 1044484
      %v1204 = vsel %vm1203, %v1161, %v1202
      %vm1205 = vcmask 1045509
      %v1206 = vsel %vm1205, %v1168, %v1204
      %vm1207 = vcmask 1046534
      %v1208 = vsel %vm1207, %v1175, %v1206
      %vm1209 = vcmask 1047559
      %v1210 = vsel %vm1209, %v1182, %v1208
      %v1212 = vsel %vm1188, %v1210, 0.0
      %v1213 = vpack.c.bf16 %v1212, %v1212
      %v1230 = vunpack.c.l.b16 %v596
      %v1231 = vunpack.c.l.b16 %v597
      %v1232 = vunpack.c.l.b16 %v598
      %v1233 = vunpack.c.l.b16 %v599
      %v1234 = vunpack.c.l.b16 %v600
      %v1235 = vunpack.c.l.b16 %v601
      %v1236 = vunpack.c.l.b16 %v602
      %v1237 = vunpack.c.l.b16 %v603
      %v1238 = vunpack.c.l.b16 %v604
      %v1239 = vunpack.c.l.b16 %v605
      %v1240 = vunpack.c.l.b16 %v606
      %v1241 = vunpack.c.l.b16 %v607
      %v1242 = vunpack.c.l.b16 %v608
      %v1243 = vunpack.c.l.b16 %v609
      %v1244 = vunpack.c.l.b16 %v610
      %v1245 = vunpack.c.l.b16 %v611
      %v1246 = vpack.c.b16 %v1231, %v1230
      %v1247 = vpack.c.b16 %v1233, %v1232
      %v1248 = vpack.c.b16 %v1235, %v1234
      %v1249 = vpack.c.b16 %v1237, %v1236
      %v1250 = vpack.c.b16 %v1239, %v1238
      %v1251 = vpack.c.b16 %v1241, %v1240
      %v1252 = vpack.c.b16 %v1243, %v1242
      %v1253 = vpack.c.b16 %v1245, %v1244
      %1262 = vmatprep.subr.bf16.mxu0 0
      %1263 = vmatpush1.bf16.msra.mxu0 %v1246
      %1264 = vmatprep.subr.bf16.mxu0 0
      %1265 = vmatpush1.bf16.msra.mxu0 %v1247
      %1266 = vmatprep.subr.bf16.mxu0 0
      %1267 = vmatpush1.bf16.msra.mxu0 %v1248
      %1268 = vmatprep.subr.bf16.mxu0 0
      %1269 = vmatpush1.bf16.msra.mxu0 %v1249
      %1270 = vmatprep.subr.bf16.mxu0 0
      %1271 = vmatpush1.bf16.msra.mxu0 %v1250
      %1272 = vmatprep.subr.bf16.mxu0 0
      %1273 = vmatpush1.bf16.msra.mxu0 %v1251
      %1274 = vmatprep.subr.bf16.mxu0 0
      %1275 = vmatpush1.bf16.msra.mxu0 %v1252
      %1276 = vmatprep.subr.bf16.mxu0 0
      %1277 = vmatpush1.bf16.msra.mxu0 %v1253
      %1278 = vmatprep.subr.bf16.mxu0 0
      %1279 = vmatpush1.bf16.msra.mxu0 0
      %1280 = vmatprep.subr.bf16.mxu0 0
      %1281 = vmatpush1.bf16.msra.mxu0 0
      %1282 = vmatprep.subr.bf16.mxu0 0
      %1283 = vmatpush1.bf16.msra.mxu0 0
      %1284 = vmatprep.subr.bf16.mxu0 0
      %1285 = vmatpush1.bf16.msra.mxu0 0
      %1286 = vmatprep.subr.bf16.mxu0 0
      %1287 = vmatpush1.bf16.msra.mxu0 0
      %1288 = vmatprep.subr.bf16.mxu0 0
      %1289 = vmatpush1.bf16.msra.mxu0 0
      %1290 = vmatprep.subr.bf16.mxu0 0
      %1291 = vmatpush1.bf16.msra.mxu0 0
      %1292 = vmatprep.subr.bf16.mxu0 0
      %1293 = vmatpush1.bf16.msra.mxu0 0
      %1294 = vmatprep.mubr.bf16.mxu0 0
      %1295 = vmatmul.mubr.bf16.gmra.mrb[0].mxu0 %v1213
      %v1296 = vpop.f32.mrb[0].mxu0
      %v1297 = vadd.f32 0.0, %v1296
      %v1298 = vpop.f32.mrb[0].mxu0
      %v1299 = vpop.f32.mrb[0].mxu0
      %v1300 = vpop.f32.mrb[0].mxu0
      %1301 = vdwg.mxu0
      %v1318 = vunpack.c.l.b16 %v578
      %v1319 = vunpack.c.l.b16 %v579
      %v1320 = vunpack.c.l.b16 %v580
      %v1321 = vunpack.c.l.b16 %v581
      %v1322 = vunpack.c.l.b16 %v582
      %v1323 = vunpack.c.l.b16 %v583
      %v1324 = vunpack.c.l.b16 %v584
      %v1325 = vunpack.c.l.b16 %v585
      %v1326 = vunpack.c.l.b16 %v586
      %v1327 = vunpack.c.l.b16 %v587
      %v1328 = vunpack.c.l.b16 %v588
      %v1329 = vunpack.c.l.b16 %v589
      %v1330 = vunpack.c.l.b16 %v590
      %v1331 = vunpack.c.l.b16 %v591
      %v1332 = vunpack.c.l.b16 %v592
      %v1333 = vunpack.c.l.b16 %v593
      %v1334 = vpack.c.b16 %v1319, %v1318
      %v1335 = vpack.c.b16 %v1321, %v1320
      %v1336 = vpack.c.b16 %v1323, %v1322
      %v1337 = vpack.c.b16 %v1325, %v1324
      %v1338 = vpack.c.b16 %v1327, %v1326
      %v1339 = vpack.c.b16 %v1329, %v1328
      %v1340 = vpack.c.b16 %v1331, %v1330
      %v1341 = vpack.c.b16 %v1333, %v1332
      %1350 = vmatprep.subr.bf16.mxu0 0
      %1351 = vmatpush1.bf16.msra.mxu0 %v1334
      %1352 = vmatprep.subr.bf16.mxu0 0
      %1353 = vmatpush1.bf16.msra.mxu0 %v1335
      %1354 = vmatprep.subr.bf16.mxu0 0
      %1355 = vmatpush1.bf16.msra.mxu0 %v1336
      %1356 = vmatprep.subr.bf16.mxu0 0
      %1357 = vmatpush1.bf16.msra.mxu0 %v1337
      %1358 = vmatprep.subr.bf16.mxu0 0
      %1359 = vmatpush1.bf16.msra.mxu0 %v1338
      %1360 = vmatprep.subr.bf16.mxu0 0
      %1361 = vmatpush1.bf16.msra.mxu0 %v1339
      %1362 = vmatprep.subr.bf16.mxu0 0
      %1363 = vmatpush1.bf16.msra.mxu0 %v1340
      %1364 = vmatprep.subr.bf16.mxu0 0
      %1365 = vmatpush1.bf16.msra.mxu0 %v1341
      %1366 = vmatprep.subr.bf16.mxu0 0
      %1367 = vmatpush1.bf16.msra.mxu0 0
      %1368 = vmatprep.subr.bf16.mxu0 0
      %1369 = vmatpush1.bf16.msra.mxu0 0
      %1370 = vmatprep.subr.bf16.mxu0 0
      %1371 = vmatpush1.bf16.msra.mxu0 0
      %1372 = vmatprep.subr.bf16.mxu0 0
      %1373 = vmatpush1.bf16.msra.mxu0 0
      %1374 = vmatprep.subr.bf16.mxu0 0
      %1375 = vmatpush1.bf16.msra.mxu0 0
      %1376 = vmatprep.subr.bf16.mxu0 0
      %1377 = vmatpush1.bf16.msra.mxu0 0
      %1378 = vmatprep.subr.bf16.mxu0 0
      %1379 = vmatpush1.bf16.msra.mxu0 0
      %1380 = vmatprep.subr.bf16.mxu0 0
      %1381 = vmatpush1.bf16.msra.mxu0 0
      %1382 = vmatprep.mubr.bf16.mxu0 0
      %1383 = vmatmul.mubr.bf16.gmra.mrb[0].mxu0 %v630
      %v1384 = vpop.f32.mrb[0].mxu0
      %v1385 = vadd.f32 %v1297, %v1384
      %v1386 = vpop.f32.mrb[0].mxu0
      %v1387 = vpop.f32.mrb[0].mxu0
      %v1388 = vpop.f32.mrb[0].mxu0
      %1389 = vdwg.mxu0
      %vm1390 = vcmp.gt.f32.partialorder %v1385, 0.0
      %v1391 = vmin.f32 %v1385, 0.0
      %v1392 = vmul.f32 %v1391, 1.442695
      %v1393 = vpow.pop %v1392
      %v1394 = vsub.f32 %v1393, 1.0
      %v1395 = vmul.f32 %v1394, 1.6732632
      %v1396 = vsel %vm1390, %v1385, %v1395
      %v1397 = vmul.f32 %v1396, 1.050701
      %v1398 = vpack.c.bf16 %v1397, %v1397
      %v1415 = vunpack.c.l.b16 %v614
      %v1416 = vunpack.c.l.b16 %v615
      %v1417 = vunpack.c.l.b16 %v616
      %v1418 = vunpack.c.l.b16 %v617
      %v1419 = vunpack.c.l.b16 %v618
      %v1420 = vunpack.c.l.b16 %v619
      %v1421 = vunpack.c.l.b16 %v620
      %v1422 = vunpack.c.l.b16 %v621
      %v1423 = vunpack.c.l.b16 %v622
      %v1424 = vunpack.c.l.b16 %v623
      %v1425 = vunpack.c.l.b16 %v624
      %v1426 = vunpack.c.l.b16 %v625
      %v1427 = vunpack.c.l.b16 %v626
      %v1428 = vunpack.c.l.b16 %v627
      %v1429 = vunpack.c.l.b16 %v628
      %v1430 = vunpack.c.l.b16 %v629
      %v1431 = vpack.c.b16 %v1416, %v1415
      %v1432 = vpack.c.b16 %v1418, %v1417
      %v1433 = vpack.c.b16 %v1420, %v1419
      %v1434 = vpack.c.b16 %v1422, %v1421
      %v1435 = vpack.c.b16 %v1424, %v1423
      %v1436 = vpack.c.b16 %v1426, %v1425
      %v1437 = vpack.c.b16 %v1428, %v1427
      %v1438 = vpack.c.b16 %v1430, %v1429
      %1447 = vmatprep.subr.bf16.mxu0 0
      %1448 = vmatpush1.bf16.msra.mxu0 %v1431
      %1449 = vmatprep.subr.bf16.mxu0 0
      %1450 = vmatpush1.bf16.msra.mxu0 %v1432
      %1451 = vmatprep.subr.bf16.mxu0 0
      %1452 = vmatpush1.bf16.msra.mxu0 %v1433
      %1453 = vmatprep.subr.bf16.mxu0 0
      %1454 = vmatpush1.bf16.msra.mxu0 %v1434
      %1455 = vmatprep.subr.bf16.mxu0 0
      %1456 = vmatpush1.bf16.msra.mxu0 %v1435
      %1457 = vmatprep.subr.bf16.mxu0 0
      %1458 = vmatpush1.bf16.msra.mxu0 %v1436
      %1459 = vmatprep.subr.bf16.mxu0 0
      %1460 = vmatpush1.bf16.msra.mxu0 %v1437
      %1461 = vmatprep.subr.bf16.mxu0 0
      %1462 = vmatpush1.bf16.msra.mxu0 %v1438
      %1463 = vmatprep.subr.bf16.mxu0 0
      %1464 = vmatpush1.bf16.msra.mxu0 0
      %1465 = vmatprep.subr.bf16.mxu0 0
      %1466 = vmatpush1.bf16.msra.mxu0 0
      %1467 = vmatprep.subr.bf16.mxu0 0
      %1468 = vmatpush1.bf16.msra.mxu0 0
      %1469 = vmatprep.subr.bf16.mxu0 0
      %1470 = vmatpush1.bf16.msra.mxu0 0
      %1471 = vmatprep.subr.bf16.mxu0 0
      %1472 = vmatpush1.bf16.msra.mxu0 0
      %1473 = vmatprep.subr.bf16.mxu0 0
      %1474 = vmatpush1.bf16.msra.mxu0 0
      %1475 = vmatprep.subr.bf16.mxu0 0
      %1476 = vmatpush1.bf16.msra.mxu0 0
      %1477 = vmatprep.subr.bf16.mxu0 0
      %1478 = vmatpush1.bf16.msra.mxu0 0
      %1479 = vmatprep.mubr.bf16.mxu0 0
      %1480 = vmatmul.mubr.bf16.gmra.mrb[0].mxu0 %v1398
      %v1481 = vpop.f32.mrb[0].mxu0
      %v1482 = vadd.f32 0.0, %v1481
      %v1483 = vpop.f32.mrb[0].mxu0
      %v1484 = vpop.f32.mrb[0].mxu0
      %v1485 = vpop.f32.mrb[0].mxu0
      %1486 = vdwg.mxu0
    $region101: #{pi_gnn_forward.1} parent=93 // loop_footer
      %s499 = sadd.s32 1, %s495
    $region102: #{pi_gnn_forward.1} parent=93 // loop_footer_branch
      %494 = sbr.rel target = $region98
    $region103: #{pi_gnn_forward.1} parent=93 // loop_exit
      _
    %v1487 = vpack.c.bf16 %v500, %v500
    %v1490 = vunpack.c.l.b16 %v85
    %v1491 = vunpack.c.l.b16 %v86
    %v1492 = vpack.c.b16 %v1491, %v1490
    %v1494 = vsel %vm197, %v1492, 0
    %vm1496 = vcmask 1043456
    %v1498 = vsel %vm1496, %v1487, 0
    %1500 = vmatprep.subr.bf16.mxu0 0
    %1501 = vmatpush1.bf16.msra.mxu0 %v1498
    %1502 = vmatprep.subr.bf16.mxu0 0
    %1503 = vmatpush1.bf16.msra.mxu0 0
    %1504 = vmatprep.subr.bf16.mxu0 0
    %1505 = vmatpush1.bf16.msra.mxu0 0
    %1506 = vmatprep.subr.bf16.mxu0 0
    %1507 = vmatpush1.bf16.msra.mxu0 0
    %1508 = vmatprep.subr.bf16.mxu0 0
    %1509 = vmatpush1.bf16.msra.mxu0 0
    %1510 = vmatprep.subr.bf16.mxu0 0
    %1511 = vmatpush1.bf16.msra.mxu0 0
    %1512 = vmatprep.subr.bf16.mxu0 0
    %1513 = vmatpush1.bf16.msra.mxu0 0
    %1514 = vmatprep.subr.bf16.mxu0 0
    %1515 = vmatpush1.bf16.msra.mxu0 0
    %1516 = vmatprep.subr.bf16.mxu0 0
    %1517 = vmatpush1.bf16.msra.mxu0 0
    %1518 = vmatprep.subr.bf16.mxu0 0
    %1519 = vmatpush1.bf16.msra.mxu0 0
    %1520 = vmatprep.subr.bf16.mxu0 0
    %1521 = vmatpush1.bf16.msra.mxu0 0
    %1522 = vmatprep.subr.bf16.mxu0 0
    %1523 = vmatpush1.bf16.msra.mxu0 0
    %1524 = vmatprep.subr.bf16.mxu0 0
    %1525 = vmatpush1.bf16.msra.mxu0 0
    %1526 = vmatprep.subr.bf16.mxu0 0
    %1527 = vmatpush1.bf16.msra.mxu0 0
    %1528 = vmatprep.subr.bf16.mxu0 0
    %1529 = vmatpush1.bf16.msra.mxu0 0
    %1530 = vmatprep.subr.bf16.mxu0 0
    %1531 = vmatpush1.bf16.msra.mxu0 0
    %1532 = vmatprep.mubr.bf16.mxu0 0
    %1533 = vmatmul.mubr.bf16.gmra.mrb[0].mxu0 %v1494
    %v1534 = vpop.f32.mrb[0].mxu0
    %v1535 = vadd.f32 0.0, %v1534
    %v1536 = vpop.f32.mrb[0].mxu0
    %v1537 = vpop.f32.mrb[0].mxu0
    %v1538 = vadd.f32 0.0, %v1537
    %v1539 = vpop.f32.mrb[0].mxu0
    %1540 = vdwg.mxu0
    %v1543 = vunpack.c.l.b16 %v87
    %v1544 = vunpack.c.l.b16 %v88
    %v1545 = vpack.c.b16 %v1544, %v1543
    %v1547 = vsel %vm197, %v1545, 0
    %1549 = vmatprep.subr.bf16.mxu0 0
    %1550 = vmatpush1.bf16.msra.mxu0 %v1498
    %1551 = vmatprep.subr.bf16.mxu0 0
    %1552 = vmatpush1.bf16.msra.mxu0 0
    %1553 = vmatprep.subr.bf16.mxu0 0
    %1554 = vmatpush1.bf16.msra.mxu0 0
    %1555 = vmatprep.subr.bf16.mxu0 0
    %1556 = vmatpush1.bf16.msra.mxu0 0
    %1557 = vmatprep.subr.bf16.mxu0 0
    %1558 = vmatpush1.bf16.msra.mxu0 0
    %1559 = vmatprep.subr.bf16.mxu0 0
    %1560 = vmatpush1.bf16.msra.mxu0 0
    %1561 = vmatprep.subr.bf16.mxu0 0
    %1562 = vmatpush1.bf16.msra.mxu0 0
    %1563 = vmatprep.subr.bf16.mxu0 0
    %1564 = vmatpush1.bf16.msra.mxu0 0
    %1565 = vmatprep.subr.bf16.mxu0 0
    %1566 = vmatpush1.bf16.msra.mxu0 0
    %1567 = vmatprep.subr.bf16.mxu0 0
    %1568 = vmatpush1.bf16.msra.mxu0 0
    %1569 = vmatprep.subr.bf16.mxu0 0
    %1570 = vmatpush1.bf16.msra.mxu0 0
    %1571 = vmatprep.subr.bf16.mxu0 0
    %1572 = vmatpush1.bf16.msra.mxu0 0
    %1573 = vmatprep.subr.bf16.mxu0 0
    %1574 = vmatpush1.bf16.msra.mxu0 0
    %1575 = vmatprep.subr.bf16.mxu0 0
    %1576 = vmatpush1.bf16.msra.mxu0 0
    %1577 = vmatprep.subr.bf16.mxu0 0
    %1578 = vmatpush1.bf16.msra.mxu0 0
    %1579 = vmatprep.subr.bf16.mxu0 0
    %1580 = vmatpush1.bf16.msra.mxu0 0
    %1581 = vmatprep.mubr.bf16.mxu0 0
    %1582 = vmatmul.mubr.bf16.gmra.mrb[0].mxu0 %v1547
    %v1583 = vpop.f32.mrb[0].mxu0
    %v1584 = vadd.f32 0.0, %v1583
    %v1585 = vpop.f32.mrb[0].mxu0
    %v1586 = vpop.f32.mrb[0].mxu0
    %v1587 = vadd.f32 0.0, %v1586
    %v1588 = vpop.f32.mrb[0].mxu0
    %1589 = vdwg.mxu0
    %vm1590 = vcmp.gt.f32.partialorder %v1535, 0.0
    %vm1591 = vcmp.gt.f32.partialorder %v1538, 0.0
    %v1592 = vmin.f32 %v1535, 0.0
    %v1593 = vmin.f32 %v1538, 0.0
    %v1594 = vmul.f32 %v1592, 1.442695
    %v1595 = vpow.pop %v1594
    %v1596 = vmul.f32 %v1593, 1.442695
    %v1597 = vpow.pop %v1596
    %v1598 = vsub.f32 %v1595, 1.0
    %v1599 = vsub.f32 %v1597, 1.0
    %v1600 = vmul.f32 %v1598, 1.6732632
    %v1601 = vmul.f32 %v1599, 1.6732632
    %v1602 = vsel %vm1590, %v1535, %v1600
    %v1603 = vsel %vm1591, %v1538, %v1601
    %v1604 = vmul.f32 %v1602, 1.050701
    %v1605 = vmul.f32 %v1603, 1.050701
    %v1606 = vpack.c.bf16 %v1605, %v1604
    %vm1607 = vcmp.gt.f32.partialorder %v1584, 0.0
    %vm1608 = vcmp.gt.f32.partialorder %v1587, 0.0
    %v1609 = vmin.f32 %v1584, 0.0
    %v1610 = vmin.f32 %v1587, 0.0
    %v1611 = vmul.f32 %v1609, 1.442695
    %v1612 = vpow.pop %v1611
    %v1613 = vmul.f32 %v1610, 1.442695
    %v1614 = vpow.pop %v1613
    %v1615 = vsub.f32 %v1612, 1.0
    %v1616 = vsub.f32 %v1614, 1.0
    %v1617 = vmul.f32 %v1615, 1.6732632
    %v1618 = vmul.f32 %v1616, 1.6732632
    %v1619 = vsel %vm1607, %v1584, %v1617
    %v1620 = vsel %vm1608, %v1587, %v1618
    %v1621 = vmul.f32 %v1619, 1.050701
    %v1622 = vmul.f32 %v1620, 1.050701
    %v1623 = vpack.c.bf16 %v1622, %v1621
    %v1640 = vunpack.c.l.b16 %v91
    %v1641 = vunpack.c.l.b16 %v92
    %v1642 = vunpack.c.l.b16 %v93
    %v1643 = vunpack.c.l.b16 %v94
    %v1644 = vunpack.c.l.b16 %v95
    %v1645 = vunpack.c.l.b16 %v96
    %v1646 = vunpack.c.l.b16 %v97
    %v1647 = vunpack.c.l.b16 %v98
    %v1648 = vunpack.c.l.b16 %v99
    %v1649 = vunpack.c.l.b16 %v100
    %v1650 = vunpack.c.l.b16 %v101
    %v1651 = vunpack.c.l.b16 %v102
    %v1652 = vunpack.c.l.b16 %v103
    %v1653 = vunpack.c.l.b16 %v104
    %v1654 = vunpack.c.l.b16 %v105
    %v1655 = vunpack.c.l.b16 %v106
    %v1656 = vpack.c.b16 %v1641, %v1640
    %v1657 = vpack.c.b16 %v1643, %v1642
    %v1658 = vpack.c.b16 %v1645, %v1644
    %v1659 = vpack.c.b16 %v1647, %v1646
    %v1660 = vpack.c.b16 %v1649, %v1648
    %v1661 = vpack.c.b16 %v1651, %v1650
    %v1662 = vpack.c.b16 %v1653, %v1652
    %v1663 = vpack.c.b16 %v1655, %v1654
    %1664 = vrot.lane.b32.xlu0 %v1656, 127
    %v1665 = vpop.permute.xlu0 %1664
    %1666 = vrot.lane.b32.xlu0 %v1657, 127
    %v1667 = vpop.permute.xlu0 %1666
    %1668 = vrot.lane.b32.xlu0 %v1658, 127
    %v1669 = vpop.permute.xlu0 %1668
    %1670 = vrot.lane.b32.xlu0 %v1659, 127
    %v1671 = vpop.permute.xlu0 %1670
    %1672 = vrot.lane.b32.xlu0 %v1660, 127
    %v1673 = vpop.permute.xlu0 %1672
    %1674 = vrot.lane.b32.xlu0 %v1661, 127
    %v1675 = vpop.permute.xlu0 %1674
    %1676 = vrot.lane.b32.xlu0 %v1662, 127
    %v1677 = vpop.permute.xlu0 %1676
    %1678 = vrot.lane.b32.xlu0 %v1663, 127
    %v1679 = vpop.permute.xlu0 %1678
    %1688 = vmatprep.subr.bf16.mxu0 0
    %1689 = vmatpush1.bf16.msra.mxu0 %v1665
    %1690 = vmatprep.subr.bf16.mxu0 0
    %1691 = vmatpush1.bf16.msra.mxu0 %v1667
    %1692 = vmatprep.subr.bf16.mxu0 0
    %1693 = vmatpush1.bf16.msra.mxu0 %v1669
    %1694 = vmatprep.subr.bf16.mxu0 0
    %1695 = vmatpush1.bf16.msra.mxu0 %v1671
    %1696 = vmatprep.subr.bf16.mxu0 0
    %1697 = vmatpush1.bf16.msra.mxu0 %v1673
    %1698 = vmatprep.subr.bf16.mxu0 0
    %1699 = vmatpush1.bf16.msra.mxu0 %v1675
    %1700 = vmatprep.subr.bf16.mxu0 0
    %1701 = vmatpush1.bf16.msra.mxu0 %v1677
    %1702 = vmatprep.subr.bf16.mxu0 0
    %1703 = vmatpush1.bf16.msra.mxu0 %v1679
    %1704 = vmatprep.subr.bf16.mxu0 0
    %1705 = vmatpush1.bf16.msra.mxu0 0
    %1706 = vmatprep.subr.bf16.mxu0 0
    %1707 = vmatpush1.bf16.msra.mxu0 0
    %1708 = vmatprep.subr.bf16.mxu0 0
    %1709 = vmatpush1.bf16.msra.mxu0 0
    %1710 = vmatprep.subr.bf16.mxu0 0
    %1711 = vmatpush1.bf16.msra.mxu0 0
    %1712 = vmatprep.subr.bf16.mxu0 0
    %1713 = vmatpush1.bf16.msra.mxu0 0
    %1714 = vmatprep.subr.bf16.mxu0 0
    %1715 = vmatpush1.bf16.msra.mxu0 0
    %1716 = vmatprep.subr.bf16.mxu0 0
    %1717 = vmatpush1.bf16.msra.mxu0 0
    %1718 = vmatprep.subr.bf16.mxu0 0
    %1719 = vmatpush1.bf16.msra.mxu0 0
    %1720 = vmatprep.mubr.bf16.mxu0 0
    %1721 = vmatmul.mubr.bf16.gmra.mrb[0].mxu0 %v1623
    %v1722 = vpop.f32.mrb[0].mxu0
    %v1723 = vadd.f32 0.0, %v1722
    %v1724 = vpop.f32.mrb[0].mxu0
    %v1725 = vpop.f32.mrb[0].mxu0
    %v1726 = vpop.f32.mrb[0].mxu0
    %1727 = vdwg.mxu0
    %1736 = vmatprep.subr.bf16.mxu0 0
    %1737 = vmatpush1.bf16.msra.mxu0 %v1656
    %1738 = vmatprep.subr.bf16.mxu0 0
    %1739 = vmatpush1.bf16.msra.mxu0 %v1657
    %1740 = vmatprep.subr.bf16.mxu0 0
    %1741 = vmatpush1.bf16.msra.mxu0 %v1658
    %1742 = vmatprep.subr.bf16.mxu0 0
    %1743 = vmatpush1.bf16.msra.mxu0 %v1659
    %1744 = vmatprep.subr.bf16.mxu0 0
    %1745 = vmatpush1.bf16.msra.mxu0 %v1660
    %1746 = vmatprep.subr.bf16.mxu0 0
    %1747 = vmatpush1.bf16.msra.mxu0 %v1661
    %1748 = vmatprep.subr.bf16.mxu0 0
    %1749 = vmatpush1.bf16.msra.mxu0 %v1662
    %1750 = vmatprep.subr.bf16.mxu0 0
    %1751 = vmatpush1.bf16.msra.mxu0 %v1663
    %1752 = vmatprep.subr.bf16.mxu0 0
    %1753 = vmatpush1.bf16.msra.mxu0 0
    %1754 = vmatprep.subr.bf16.mxu0 0
    %1755 = vmatpush1.bf16.msra.mxu0 0
    %1756 = vmatprep.subr.bf16.mxu0 0
    %1757 = vmatpush1.bf16.msra.mxu0 0
    %1758 = vmatprep.subr.bf16.mxu0 0
    %1759 = vmatpush1.bf16.msra.mxu0 0
    %1760 = vmatprep.subr.bf16.mxu0 0
    %1761 = vmatpush1.bf16.msra.mxu0 0
    %1762 = vmatprep.subr.bf16.mxu0 0
    %1763 = vmatpush1.bf16.msra.mxu0 0
    %1764 = vmatprep.subr.bf16.mxu0 0
    %1765 = vmatpush1.bf16.msra.mxu0 0
    %1766 = vmatprep.subr.bf16.mxu0 0
    %1767 = vmatpush1.bf16.msra.mxu0 0
    %1768 = vmatprep.mubr.bf16.mxu0 0
    %1769 = vmatmul.mubr.bf16.gmra.mrb[0].mxu0 %v1606
    %v1770 = vpop.f32.mrb[0].mxu0
    %v1771 = vadd.f32 %v1723, %v1770
    %v1772 = vpop.f32.mrb[0].mxu0
    %v1773 = vpop.f32.mrb[0].mxu0
    %v1774 = vpop.f32.mrb[0].mxu0
    %1775 = vdwg.mxu0
    %vm1776 = vcmp.gt.f32.partialorder %v501, 0.0
    %vm1777 = vcmp.gt.f32.partialorder %v502, 0.0
    %v1778 = vmin.f32 %v501, 0.0
    %v1779 = vmin.f32 %v502, 0.0
    %v1780 = vmul.f32 %v1778, 1.442695
    %v1781 = vpow.pop %v1780
    %v1782 = vmul.f32 %v1779, 1.442695
    %v1783 = vpow.pop %v1782
    %v1784 = vsub.f32 %v1781, 1.0
    %v1785 = vsub.f32 %v1783, 1.0
    %v1786 = vmul.f32 %v1784, 1.6732632
    %v1787 = vmul.f32 %v1785, 1.6732632
    %v1788 = vsel %vm1776, %v501, %v1786
    %v1789 = vsel %vm1777, %v502, %v1787
    %v1790 = vmul.f32 %v1788, 1.050701
    %v1791 = vmul.f32 %v1789, 1.050701
    %v1792 = vpack.c.bf16 %v1791, %v1790
    %1793 = vrot.lane.b32.xlu0 %v1656, 126
    %v1794 = vpop.permute.xlu0 %1793
    %1795 = vrot.lane.b32.xlu0 %v1657, 126
    %v1796 = vpop.permute.xlu0 %1795
    %1797 = vrot.lane.b32.xlu0 %v1658, 126
    %v1798 = vpop.permute.xlu0 %1797
    %1799 = vrot.lane.b32.xlu0 %v1659, 126
    %v1800 = vpop.permute.xlu0 %1799
    %1801 = vrot.lane.b32.xlu0 %v1660, 126
    %v1802 = vpop.permute.xlu0 %1801
    %1803 = vrot.lane.b32.xlu0 %v1661, 126
    %v1804 = vpop.permute.xlu0 %1803
    %1805 = vrot.lane.b32.xlu0 %v1662, 126
    %v1806 = vpop.permute.xlu0 %1805
    %1807 = vrot.lane.b32.xlu0 %v1663, 126
    %v1808 = vpop.permute.xlu0 %1807
    %1817 = vmatprep.subr.bf16.mxu0 0
    %1818 = vmatpush1.bf16.msra.mxu0 %v1794
    %1819 = vmatprep.subr.bf16.mxu0 0
    %1820 = vmatpush1.bf16.msra.mxu0 %v1796
    %1821 = vmatprep.subr.bf16.mxu0 0
    %1822 = vmatpush1.bf16.msra.mxu0 %v1798
    %1823 = vmatprep.subr.bf16.mxu0 0
    %1824 = vmatpush1.bf16.msra.mxu0 %v1800
    %1825 = vmatprep.subr.bf16.mxu0 0
    %1826 = vmatpush1.bf16.msra.mxu0 %v1802
    %1827 = vmatprep.subr.bf16.mxu0 0
    %1828 = vmatpush1.bf16.msra.mxu0 %v1804
    %1829 = vmatprep.subr.bf16.mxu0 0
    %1830 = vmatpush1.bf16.msra.mxu0 %v1806
    %1831 = vmatprep.subr.bf16.mxu0 0
    %1832 = vmatpush1.bf16.msra.mxu0 %v1808
    %1833 = vmatprep.subr.bf16.mxu0 0
    %1834 = vmatpush1.bf16.msra.mxu0 0
    %1835 = vmatprep.subr.bf16.mxu0 0
    %1836 = vmatpush1.bf16.msra.mxu0 0
    %1837 = vmatprep.subr.bf16.mxu0 0
    %1838 = vmatpush1.bf16.msra.mxu0 0
    %1839 = vmatprep.subr.bf16.mxu0 0
    %1840 = vmatpush1.bf16.msra.mxu0 0
    %1841 = vmatprep.subr.bf16.mxu0 0
    %1842 = vmatpush1.bf16.msra.mxu0 0
    %1843 = vmatprep.subr.bf16.mxu0 0
    %1844 = vmatpush1.bf16.msra.mxu0 0
    %1845 = vmatprep.subr.bf16.mxu0 0
    %1846 = vmatpush1.bf16.msra.mxu0 0
    %1847 = vmatprep.subr.bf16.mxu0 0
    %1848 = vmatpush1.bf16.msra.mxu0 0
    %1849 = vmatprep.mubr.bf16.mxu0 0
    %1850 = vmatmul.mubr.bf16.gmra.mrb[0].mxu0 %v1792
    %v1851 = vpop.f32.mrb[0].mxu0
    %v1852 = vadd.f32 0.0, %v1851
    %v1853 = vpop.f32.mrb[0].mxu0
    %v1854 = vpop.f32.mrb[0].mxu0
    %v1855 = vpop.f32.mrb[0].mxu0
    %1856 = vdwg.mxu0
    %v1857 = vadd.f32 %v1771, %v1852
    %v1858 = vadd.f32 %v386, %v1857
    %v1859 = vsub.f32 0.0, %v1858
    %1860 = vmatprep.subr.mxu0 0.0
    %1861 = vmatpush1.msra.mxu0 %v1858
    %1862 = vmatprep.subr.mxu0 0.0
    %1863 = vmatpush1.msra.mxu0 %v1859
    %1864 = vmatprep.subr.mxu0 0.0
    %1865 = vmatpush1.msra.mxu0 0.0
    %1866 = vmatprep.subr.mxu0 0.0
    %1867 = vmatpush1.msra.mxu0 0.0
    %1868 = vmatprep.subr.mxu0 0.0
    %1869 = vmatpush1.msra.mxu0 0.0
    %1870 = vmatprep.subr.mxu0 0.0
    %1871 = vmatpush1.msra.mxu0 0.0
    %1872 = vmatprep.subr.mxu0 0.0
    %1873 = vmatpush1.msra.mxu0 0.0
    %1874 = vmatprep.subr.mxu0 0.0
    %1875 = vmatpush1.msra.mxu0 0.0
    %1876 = vmatprep.subr.mxu0 0.0
    %1877 = vmatpush1.msra.mxu0 0.0
    %1878 = vmatprep.subr.mxu0 0.0
    %1879 = vmatpush1.msra.mxu0 0.0
    %1880 = vmatprep.subr.mxu0 0.0
    %1881 = vmatpush1.msra.mxu0 0.0
    %1882 = vmatprep.subr.mxu0 0.0
    %1883 = vmatpush1.msra.mxu0 0.0
    %1884 = vmatprep.subr.mxu0 0.0
    %1885 = vmatpush1.msra.mxu0 0.0
    %1886 = vmatprep.subr.mxu0 0.0
    %1887 = vmatpush1.msra.mxu0 0.0
    %1888 = vmatprep.subr.mxu0 0.0
    %1889 = vmatpush1.msra.mxu0 0.0
    %1890 = vmatprep.subr.mxu0 0.0
    %1891 = vmatpush1.msra.mxu0 0.0
    %1892 = vmatprep.subr.mxu0 0.0
    %1893 = vmatpush1.msra.mxu0 0.0
    %1894 = vmatprep.subr.mxu0 0.0
    %1895 = vmatpush1.msra.mxu0 0.0
    %1896 = vmatprep.subr.mxu0 0.0
    %1897 = vmatpush1.msra.mxu0 0.0
    %1898 = vmatprep.subr.mxu0 0.0
    %1899 = vmatpush1.msra.mxu0 0.0
    %1900 = vmatprep.subr.mxu0 0.0
    %1901 = vmatpush1.msra.mxu0 0.0
    %1902 = vmatprep.subr.mxu0 0.0
    %1903 = vmatpush1.msra.mxu0 0.0
    %1904 = vmatprep.subr.mxu0 0.0
    %1905 = vmatpush1.msra.mxu0 0.0
    %1906 = vmatprep.subr.mxu0 0.0
    %1907 = vmatpush1.msra.mxu0 0.0
    %1908 = vmatprep.subr.mxu0 0.0
    %1909 = vmatpush1.msra.mxu0 0.0
    %1910 = vmatprep.subr.mxu0 0.0
    %1911 = vmatpush1.msra.mxu0 0.0
    %1912 = vmatprep.subr.mxu0 0.0
    %1913 = vmatpush1.msra.mxu0 0.0
    %1914 = vmatprep.subr.mxu0 0.0
    %1915 = vmatpush1.msra.mxu0 0.0
    %1916 = vmatprep.subr.mxu0 0.0
    %1917 = vmatpush1.msra.mxu0 0.0
    %1918 = vmatprep.subr.mxu0 0.0
    %1919 = vmatpush1.msra.mxu0 0.0
    %1920 = vmatprep.subr.mxu0 0.0
    %1921 = vmatpush1.msra.mxu0 0.0
    %1922 = vmatprep.subr.mxu0 0.0
    %1923 = vmatpush1.msra.mxu0 0.0
    %1924 = vmatprep.mubr.f32.mxu0 0.0
    %1925 = vmatmul.mubr.f32.gmra.mrb[0].mxu0 %v307
    %v1926 = vpop.f32.mrb[0].mxu0
    %v1927 = vadd.f32 0.0, %v1926
    %v1928 = vpop.f32.mrb[0].mxu0
    %1929 = vdwg.mxu0
    %v1930 = vmul.f32 %v75, %v1858
    %v1931 = vmul.f32 %v76, %v1859
    %v1932 = vand.u32 2147483647, %v1858
    %v1933 = vand.u32 2147483647, %v1859
    %v1934 = vadd.f32 %v1932, 1e-32
    %v1935 = vadd.f32 %v1933, 1e-32
    %v1936 = vlog2.pop %v1934
    %v1937 = vmul.f32 %v1936, 0.6931472
    %v1938 = vlog2.pop %v1935
    %v1939 = vmul.f32 %v1938, 0.6931472
    %v1940 = vmul.f32 %v1937, 0.852
    %v1941 = vmul.f32 %v1939, 0.852
    %v1942 = vmul.f32 %v1940, 1.442695
    %v1943 = vpow.pop %v1942
    %v1944 = vmul.f32 %v1941, 1.442695
    %v1945 = vpow.pop %v1944
    %v1946 = vmul.f32 %v1930, %v1943
    %v1947 = vmul.f32 %v1931, %v1945
    %1948 = vmatprep.subr.mxu0 0.0
    %1949 = vmatpush1.msra.mxu0 %v1946
    %1950 = vmatprep.subr.mxu0 0.0
    %1951 = vmatpush1.msra.mxu0 %v1947
    %1952 = vmatprep.subr.mxu0 0.0
    %1953 = vmatpush1.msra.mxu0 0.0
    %1954 = vmatprep.subr.mxu0 0.0
    %1955 = vmatpush1.msra.mxu0 0.0
    %1956 = vmatprep.subr.mxu0 0.0
    %1957 = vmatpush1.msra.mxu0 0.0
    %1958 = vmatprep.subr.mxu0 0.0
    %1959 = vmatpush1.msra.mxu0 0.0
    %1960 = vmatprep.subr.mxu0 0.0
    %1961 = vmatpush1.msra.mxu0 0.0
    %1962 = vmatprep.subr.mxu0 0.0
    %1963 = vmatpush1.msra.mxu0 0.0
    %1964 = vmatprep.subr.mxu0 0.0
    %1965 = vmatpush1.msra.mxu0 0.0
    %1966 = vmatprep.subr.mxu0 0.0
    %1967 = vmatpush1.msra.mxu0 0.0
    %1968 = vmatprep.subr.mxu0 0.0
    %1969 = vmatpush1.msra.mxu0 0.0
    %1970 = vmatprep.subr.mxu0 0.0
    %1971 = vmatpush1.msra.mxu0 0.0
    %1972 = vmatprep.subr.mxu0 0.0
    %1973 = vmatpush1.msra.mxu0 0.0
    %1974 = vmatprep.subr.mxu0 0.0
    %1975 = vmatpush1.msra.mxu0 0.0
    %1976 = vmatprep.subr.mxu0 0.0
    %1977 = vmatpush1.msra.mxu0 0.0
    %1978 = vmatprep.subr.mxu0 0.0
    %1979 = vmatpush1.msra.mxu0 0.0
    %1980 = vmatprep.subr.mxu0 0.0
    %1981 = vmatpush1.msra.mxu0 0.0
    %1982 = vmatprep.subr.mxu0 0.0
    %1983 = vmatpush1.msra.mxu0 0.0
    %1984 = vmatprep.subr.mxu0 0.0
    %1985 = vmatpush1.msra.mxu0 0.0
    %1986 = vmatprep.subr.mxu0 0.0
    %1987 = vmatpush1.msra.mxu0 0.0
    %1988 = vmatprep.subr.mxu0 0.0
    %1989 = vmatpush1.msra.mxu0 0.0
    %1990 = vmatprep.subr.mxu0 0.0
    %1991 = vmatpush1.msra.mxu0 0.0
    %1992 = vmatprep.subr.mxu0 0.0
    %1993 = vmatpush1.msra.mxu0 0.0
    %1994 = vmatprep.subr.mxu0 0.0
    %1995 = vmatpush1.msra.mxu0 0.0
    %1996 = vmatprep.subr.mxu0 0.0
    %1997 = vmatpush1.msra.mxu0 0.0
    %1998 = vmatprep.subr.mxu0 0.0
    %1999 = vmatpush1.msra.mxu0 0.0
    %2000 = vmatprep.subr.mxu0 0.0
    %2001 = vmatpush1.msra.mxu0 0.0
    %2002 = vmatprep.subr.mxu0 0.0
    %2003 = vmatpush1.msra.mxu0 0.0
    %2004 = vmatprep.subr.mxu0 0.0
    %2005 = vmatpush1.msra.mxu0 0.0
    %2006 = vmatprep.subr.mxu0 0.0
    %2007 = vmatpush1.msra.mxu0 0.0
    %2008 = vmatprep.subr.mxu0 0.0
    %2009 = vmatpush1.msra.mxu0 0.0
    %2010 = vmatprep.subr.mxu0 0.0
    %2011 = vmatpush1.msra.mxu0 0.0
    %2012 = vmatprep.mubr.f32.mxu0 0.0
    %2013 = vmatmul.mubr.f32.gmra.mrb[0].mxu0 %v307
    %v2014 = vpop.f32.mrb[0].mxu0
    %v2015 = vadd.f32 0.0, %v2014
    %v2016 = vpop.f32.mrb[0].mxu0
    %2017 = vdwg.mxu0
    loop: start=0, step=1, limit=2
    $region104: #{pi_gnn_forward.1} parent=93 // loop_pre_header
      _
    $region105: #{pi_gnn_forward.1} parent=93 // loop_header
      %s2019 = sphi 0, %s2023
      %p2020 = scmp.ge.s32.totalorder %s2019, 2
      %v2024 = vphi %v72, %v2101
    $region106: #{pi_gnn_forward.1} parent=93 // loop_header_branch
      %2022 = sbr.rel (%p2020) target = $region110
    $region107: #{pi_gnn_forward.1} parent=93 // loop_body
      %v2026 = vsel %vm197, %v84, 0
      %2028 = vmatprep.subr.mxu0 0.0
      %2029 = vmatpush1.msra.mxu0 %v2024
      %2030 = vmatprep.subr.mxu0 0.0
      %2031 = vmatpush1.msra.mxu0 0.0
      %2032 = vmatprep.subr.mxu0 0.0
      %2033 = vmatpush1.msra.mxu0 0.0
      %2034 = vmatprep.subr.mxu0 0.0
      %2035 = vmatpush1.msra.mxu0 0.0
      %2036 = vmatprep.subr.mxu0 0.0
      %2037 = vmatpush1.msra.mxu0 0.0
      %2038 = vmatprep.subr.mxu0 0.0
      %2039 = vmatpush1.msra.mxu0 0.0
      %2040 = vmatprep.subr.mxu0 0.0
      %2041 = vmatpush1.msra.mxu0 0.0
      %2042 = vmatprep.subr.mxu0 0.0
      %2043 = vmatpush1.msra.mxu0 0.0
      %2044 = vmatprep.subr.mxu0 0.0
      %2045 = vmatpush1.msra.mxu0 0.0
      %2046 = vmatprep.subr.mxu0 0.0
      %2047 = vmatpush1.msra.mxu0 0.0
      %2048 = vmatprep.subr.mxu0 0.0
      %2049 = vmatpush1.msra.mxu0 0.0
      %2050 = vmatprep.subr.mxu0 0.0
      %2051 = vmatpush1.msra.mxu0 0.0
      %2052 = vmatprep.subr.mxu0 0.0
      %2053 = vmatpush1.msra.mxu0 0.0
      %2054 = vmatprep.subr.mxu0 0.0
      %2055 = vmatpush1.msra.mxu0 0.0
      %2056 = vmatprep.subr.mxu0 0.0
      %2057 = vmatpush1.msra.mxu0 0.0
      %2058 = vmatprep.subr.mxu0 0.0
      %2059 = vmatpush1.msra.mxu0 0.0
      %2060 = vmatprep.subr.mxu0 0.0
      %2061 = vmatpush1.msra.mxu0 0.0
      %2062 = vmatprep.subr.mxu0 0.0
      %2063 = vmatpush1.msra.mxu0 0.0
      %2064 = vmatprep.subr.mxu0 0.0
      %2065 = vmatpush1.msra.mxu0 0.0
      %2066 = vmatprep.subr.mxu0 0.0
      %2067 = vmatpush1.msra.mxu0 0.0
      %2068 = vmatprep.subr.mxu0 0.0
      %2069 = vmatpush1.msra.mxu0 0.0
      %2070 = vmatprep.subr.mxu0 0.0
      %2071 = vmatpush1.msra.mxu0 0.0
      %2072 = vmatprep.subr.mxu0 0.0
      %2073 = vmatpush1.msra.mxu0 0.0
      %2074 = vmatprep.subr.mxu0 0.0
      %2075 = vmatpush1.msra.mxu0 0.0
      %2076 = vmatprep.subr.mxu0 0.0
      %2077 = vmatpush1.msra.mxu0 0.0
      %2078 = vmatprep.subr.mxu0 0.0
      %2079 = vmatpush1.msra.mxu0 0.0
      %2080 = vmatprep.subr.mxu0 0.0
      %2081 = vmatpush1.msra.mxu0 0.0
      %2082 = vmatprep.subr.mxu0 0.0
      %2083 = vmatpush1.msra.mxu0 0.0
      %2084 = vmatprep.subr.mxu0 0.0
      %2085 = vmatpush1.msra.mxu0 0.0
      %2086 = vmatprep.subr.mxu0 0.0
      %2087 = vmatpush1.msra.mxu0 0.0
      %2088 = vmatprep.subr.mxu0 0.0
      %2089 = vmatpush1.msra.mxu0 0.0
      %2090 = vmatprep.subr.mxu0 0.0
      %2091 = vmatpush1.msra.mxu0 0.0
      %2092 = vmatprep.mubr.f32.mxu0 0.0
      %2093 = vmatmul.mubr.f32.gmra.mrb[0].mxu0 %v2026
      %v2094 = vpop.f32.mrb[0].mxu0
      %v2095 = vadd.f32 0.0, %v2094
      %v2096 = vpop.f32.mrb[0].mxu0
      %2097 = vdwg.mxu0
      %v2098 = vsub.f32 %v2095, %v2015
      %v2099 = vmul.f32 %v2098, %v79
      %vm2100 = vcmp.gt.f32.partialorder %v74, 0.0
      %v2101 = vsel %vm2100, %v72, %v2099
    $region108: #{pi_gnn_forward.1} parent=93 // loop_footer
      %s2023 = sadd.s32 1, %s2019
    $region109: #{pi_gnn_forward.1} parent=93 // loop_footer_branch
      %2018 = sbr.rel target = $region105
    $region110: #{pi_gnn_forward.1} parent=93 // loop_exit
      _
    %2102 = vmatprep.subr.mxu0 0.0
    %2103 = vmatpush1.msra.mxu0 %v2024
    %2104 = vmatprep.subr.mxu0 0.0
    %2105 = vmatpush1.msra.mxu0 0.0
    %2106 = vmatprep.subr.mxu0 0.0
    %2107 = vmatpush1.msra.mxu0 0.0
    %2108 = vmatprep.subr.mxu0 0.0
    %2109 = vmatpush1.msra.mxu0 0.0
    %2110 = vmatprep.subr.mxu0 0.0
    %2111 = vmatpush1.msra.mxu0 0.0
    %2112 = vmatprep.subr.mxu0 0.0
    %2113 = vmatpush1.msra.mxu0 0.0
    %2114 = vmatprep.subr.mxu0 0.0
    %2115 = vmatpush1.msra.mxu0 0.0
    %2116 = vmatprep.subr.mxu0 0.0
    %2117 = vmatpush1.msra.mxu0 0.0
    %2118 = vmatprep.subr.mxu0 0.0
    %2119 = vmatpush1.msra.mxu0 0.0
    %2120 = vmatprep.subr.mxu0 0.0
    %2121 = vmatpush1.msra.mxu0 0.0
    %2122 = vmatprep.subr.mxu0 0.0
    %2123 = vmatpush1.msra.mxu0 0.0
    %2124 = vmatprep.subr.mxu0 0.0
    %2125 = vmatpush1.msra.mxu0 0.0
    %2126 = vmatprep.subr.mxu0 0.0
    %2127 = vmatpush1.msra.mxu0 0.0
    %2128 = vmatprep.subr.mxu0 0.0
    %2129 = vmatpush1.msra.mxu0 0.0
    %2130 = vmatprep.subr.mxu0 0.0
    %2131 = vmatpush1.msra.mxu0 0.0
    %2132 = vmatprep.subr.mxu0 0.0
    %2133 = vmatpush1.msra.mxu0 0.0
    %2134 = vmatprep.subr.mxu0 0.0
    %2135 = vmatpush1.msra.mxu0 0.0
    %2136 = vmatprep.subr.mxu0 0.0
    %2137 = vmatpush1.msra.mxu0 0.0
    %2138 = vmatprep.subr.mxu0 0.0
    %2139 = vmatpush1.msra.mxu0 0.0
    %2140 = vmatprep.subr.mxu0 0.0
    %2141 = vmatpush1.msra.mxu0 0.0
    %2142 = vmatprep.subr.mxu0 0.0
    %2143 = vmatpush1.msra.mxu0 0.0
    %2144 = vmatprep.subr.mxu0 0.0
    %2145 = vmatpush1.msra.mxu0 0.0
    %2146 = vmatprep.subr.mxu0 0.0
    %2147 = vmatpush1.msra.mxu0 0.0
    %2148 = vmatprep.subr.mxu0 0.0
    %2149 = vmatpush1.msra.mxu0 0.0
    %2150 = vmatprep.subr.mxu0 0.0
    %2151 = vmatpush1.msra.mxu0 0.0
    %2152 = vmatprep.subr.mxu0 0.0
    %2153 = vmatpush1.msra.mxu0 0.0
    %2154 = vmatprep.subr.mxu0 0.0
    %2155 = vmatpush1.msra.mxu0 0.0
    %2156 = vmatprep.subr.mxu0 0.0
    %2157 = vmatpush1.msra.mxu0 0.0
    %2158 = vmatprep.subr.mxu0 0.0
    %2159 = vmatpush1.msra.mxu0 0.0
    %2160 = vmatprep.subr.mxu0 0.0
    %2161 = vmatpush1.msra.mxu0 0.0
    %2162 = vmatprep.subr.mxu0 0.0
    %2163 = vmatpush1.msra.mxu0 0.0
    %2164 = vmatprep.subr.mxu0 0.0
    %2165 = vmatpush1.msra.mxu0 0.0
    %2166 = vmatprep.mubr.f32.mxu0 0.0
    %2167 = vmatmul.mubr.f32.gmra.mrb[0].mxu0 %v199
    %v2168 = vpop.f32.mrb[0].mxu0
    %v2169 = vadd.f32 0.0, %v2168
    %v2170 = vpop.f32.mrb[0].mxu0
    %2171 = vmatprep.mubr.f32.mxu0 0.0
    %2172 = vmatmul.mubr.f32.gmra.mrb[0].mxu0 %v202
    %v2173 = vpop.f32.mrb[0].mxu0
    %v2174 = vadd.f32 0.0, %v2173
    %v2175 = vpop.f32.mrb[0].mxu0
    %2176 = vdwg.mxu0
    %v2177 = vand.u32 2147483647, %v2169
    %v2178 = vand.u32 2147483647, %v2174
    %v2179 = vmul.f32 %v2177, %v77
    %v2180 = vmul.f32 %v2178, %v78
    %v2181 = vadd.f32 %v2179, 1e-32
    %v2182 = vadd.f32 %v2180, 1e-32
    %v2183 = vlog2.pop %v2181
    %v2184 = vmul.f32 %v2183, 0.6931472
    %v2185 = vlog2.pop %v2182
    %v2186 = vmul.f32 %v2185, 0.6931472
    %v2187 = vmul.f32 %v2184, 0.5399568
    %v2188 = vmul.f32 %v2186, 0.5399568
    %v2189 = vmul.f32 %v2187, 1.442695
    %v2190 = vpow.pop %v2189
    %v2191 = vmul.f32 %v2188, 1.442695
    %v2192 = vpow.pop %v2191
    %vm2193 = vcmp.gt.f32.partialorder %v2169, 0.0
    %vm2194 = vcmp.gt.f32.partialorder %v2174, 0.0
    %vm2195 = vcmp.lt.f32.partialorder %v2169, 0.0
    %vm2196 = vcmp.lt.f32.partialorder %v2174, 0.0
    %v2197 = vsel %vm2195, -1.0, 0.0
    %v2198 = vsel %vm2196, -1.0, 0.0
    %v2199 = vsel %vm2193, 1.0, %v2197
    %v2200 = vsel %vm2194, 1.0, %v2198
    %v2201 = vmul.f32 %v2199, %v2190
    %v2202 = vmul.f32 %v2200, %v2192
  $region94: #{pi_gnn_forward.1} parent=0 // loop_footer
    %s384 = sadd.s32 1, %s380
  $region95: #{pi_gnn_forward.1} parent=0 // loop_footer_branch
    %379 = sbr.rel target = $region91
  $region96: #{pi_gnn_forward.1} parent=0 // loop_exit
    _
  %vm2203 = vcmask 7168
  %2204 = vst.msk [vmem:[%s22] sm:$0xff] %vm2203, %v390
  // Predicated region
  $region111: #{pi_gnn_forward.1} parent=0 // pred_check
    _
  $region112: #{pi_gnn_forward.1} parent=0 // pred_check_branch
    %2206 = sbr.rel (0) target = $region114
  $region113: #{pi_gnn_forward.1} parent=0 // pred_region
    _
  $region114: #{pi_gnn_forward.1} parent=0 // pred_fallthru
    _
  // Predicated region
  $region115: #{pi_gnn_forward.1} parent=0 // pred_check
    _
  $region116: #{pi_gnn_forward.1} parent=0 // pred_check_branch
    %2208 = sbr.rel (0) target = $region118
  $region117: #{pi_gnn_forward.1} parent=0 // pred_region
    _
  $region118: #{pi_gnn_forward.1} parent=0 // pred_fallthru
    _

</llo_original>
